<compile_context>
chip_gen: v6e
topology: v6e:2x2x1
jax: 0.10.0
libtpu: 0.0.40
codegen_flags: <defaults>
</compile_context>

<pallas_src>
import functools

import jax
import jax.numpy as jnp
from jax import lax
from jax.experimental import pallas as pl
from jax.experimental.pallas import tpu as pltpu


def _decoder_kernel(te_ref, xt_ref, t_ref, inv_dt_ref, wbig_ref, b1_ref, w2_ref, b2_ref,
                    out_ref, *, hidden_dtype):
    """One n_blk-wide block of eval points; weights stay VMEM-resident across blocks.

    Per-block shapes ('nb' = n_blk):
      te_ref     : (1, nb)        eval times (streamed, lane-dense)
      xt_ref     : (d_x, nb)      eval coords transposed (streamed, lane-dense)
      t_ref      : (T, 1)         trajectory times, ascending (resident)
      inv_dt_ref : (T, 1)         1/(t[i+1]-t[i]); 0 for degenerate / last row (resident)
      wbig_ref   : (d_h, T+d_x)   [ (z@w1)^T | (w_space@w1)^T ] (resident, f32)
      b1_ref     : (d_h, 1) f32,  w2_ref: (d_u, d_h) [hidden_dtype],  b2_ref: (d_u, 1) f32
      out_ref    : (d_u, nb)      lane-dense output block
    """
    te = te_ref[...]                                   # (1, nb) f32
    xt = xt_ref[...]                                   # (d_x, nb) f32
    tk = t_ref[...]                                    # (T, 1) f32
    inv_dt = inv_dt_ref[...]                           # (T, 1) f32
    T = tk.shape[0]
    nb = te.shape[1]

    # ---- linear-interpolation weights (all f32, stays in vregs) ----
    # left interval index per eval point: idx = clip(#(t <= t_eval) - 1, 0, T-2)
    cmp = (te >= tk).astype(jnp.int32)                 # (T, nb)
    idx = jnp.sum(cmp, axis=0, keepdims=True) - 1      # (1, nb)
    idx = jnp.clip(idx, 0, max(T - 2, 0))

    iota = lax.broadcasted_iota(jnp.int32, (T, nb), 0)
    left = iota == idx                                  # one-hot of t[idx]
    right = iota == idx + 1                             # one-hot of t[idx+1]

    t_left = jnp.sum(jnp.where(left, tk, 0.0), axis=0, keepdims=True)      # (1, nb)
    inv_d = jnp.sum(jnp.where(left, inv_dt, 0.0), axis=0, keepdims=True)   # (1, nb)
    # inv_d == 0 for degenerate (duplicate-timestamp) intervals -> w = 0 (left endpoint).
    # The clip also clamps eval points outside [t[0], t[-1]] to the edge values (np.interp
    # semantics) AND keeps garbage lanes of a partial last block finite (their outputs are
    # discarded by Pallas) -- do not remove this clip/zero-guard.
    w = jnp.clip((te - t_left) * inv_d, 0.0, 1.0)                           # (1, nb)

    # interpolation weight matrix, eval points on lanes: z_eval^T = (z@w1)^T @ w_interp
    w_interp = jnp.where(left, 1.0 - w, 0.0) + jnp.where(right, w, 0.0)     # (T, nb)

    # ---- single fused matmul: interpolation + space_proj + first MLP layer ----
    # RHS sublane concat is tile-friendly (first piece has T rows); stays in f32.
    rhs = jnp.concatenate([w_interp, xt], axis=0)                           # (T+d_x, nb)
    pre = (jnp.dot(wbig_ref[...], rhs, preferred_element_type=jnp.float32)
           + b1_ref[...])                                                   # (d_h, nb) f32
    hid = jnp.tanh(pre)

    # ---- output layer (optionally bf16 MXU inputs, f32 accumulation) ----
    out = jnp.dot(w2_ref[...], hid.astype(hidden_dtype),
                  preferred_element_type=jnp.float32) + b2_ref[...]         # (d_u, nb) f32
    out_ref[...] = out.astype(out_ref.dtype)                                # lane-dense store


def _round_up(x, m):
    return ((x + m - 1) // m) * m


def _choose_n_blk(n, requested):
    """Eval-point block size: multiple of 128 lanes, 1024-4096 preferred, even #blocks."""
    if requested is not None:
        return max(128, _round_up(min(requested, max(n, 1)), 128))
    if n <= 1024:
        return max(128, _round_up(n, 128))      # single block: per-step overhead negligible
    nb = _round_up(pl.cdiv(n, 8), 128)          # aim for ~8 blocks (>= 4 per v7x TC)
    nb = min(max(nb, 1024), 4096)
    blocks = pl.cdiv(n, nb)
    if blocks > 1 and blocks % 2 == 1:          # keep both v7x TensorCores balanced
        nb2 = max(128, _round_up(pl.cdiv(n, blocks + 1), 128))
        if pl.cdiv(n, nb2) % 2 == 0:
            nb = nb2
    return nb


def continuous_decoder(t_eval, x_eval, t, z, params, *,
                       n_blk=None, hidden_matmul_dtype=jnp.float32,
                       out_dtype=jnp.float32, transposed_output=False):
    """JAX wrapper. t_eval:(n,), x_eval:(n,d_x), t:(time,), z:(time,d_z) -> (n,d_u)
    (or (d_u, n) when transposed_output=True, which avoids one full output HBM round trip).
    """
    if t_eval.ndim != 1 or t.ndim != 1:
        raise ValueError("t and t_eval should be 1-dimensional arrays.")
    if x_eval.ndim != 2 or z.ndim != 2:
        raise ValueError("x_eval and z should be 2-dimensional arrays.")
    if t_eval.shape[0] != x_eval.shape[0]:
        raise ValueError("t_eval and x_eval must have matching first dimension.")
    if t.shape[0] != z.shape[0]:
        raise ValueError("t and z must have matching first dimension.")

    n, d_x = x_eval.shape
    T, d_z = z.shape
    w_space, w1, b1, w2, b2 = params            # matmul layout: (in_features, out_features)
    d_h = w1.shape[1]
    d_u = w2.shape[1]

    f32 = jnp.float32
    hidden_dtype = jnp.dtype(hidden_matmul_dtype)
    # bf16 matmul inputs buy nothing on v5e (no bf16 VPU; these tiny-K matmuls are nowhere
    # near MXU-bound) -- force f32 there so the casts don't waste VALU slots.
    if hidden_dtype != jnp.dtype(f32):
        try:
            kind = jax.devices()[0].device_kind.lower()
        except Exception:
            kind = ""
        if "v5 lite" in kind or "v5e" in kind or "v5lite" in kind:
            hidden_dtype = jnp.dtype(f32)

    # ---- one-time fused resident weights (features on sublanes) ----
    zw1_t = (z.astype(f32) @ w1.astype(f32)).T                   # (d_h, T)
    ws1_t = (w_space.astype(f32) @ w1.astype(f32)).T             # (d_h, d_x)
    wbig = jnp.concatenate([zw1_t, ws1_t], axis=1)               # (d_h, T + d_x)
    b1_col = b1.reshape(d_h, 1).astype(f32)
    w2_t = w2.astype(f32).T.astype(hidden_dtype)                 # (d_u, d_h)
    b2_col = b2.reshape(d_u, 1).astype(f32)

    t_col = t.reshape(T, 1).astype(f32)
    if T > 1:
        dt = t_col[1:, 0] - t_col[:-1, 0]
        inv = jnp.where(dt > 0, 1.0 / jnp.where(dt > 0, dt, 1.0), 0.0)
        inv_dt = jnp.concatenate([inv, jnp.zeros((1,), f32)]).reshape(T, 1)
    else:
        inv_dt = jnp.zeros((1, 1), f32)

    # ---- streamed inputs (lane-dense blocks over eval points) ----
    te_row = t_eval.reshape(1, n).astype(f32)    # metadata-only reshape, no HBM copy
    # NOTE: this transpose is the one remaining wrapper-side layout op (~32 B/eval-point of
    # extra HBM traffic). Callers that already hold coordinates as (d_x, n) should feed
    # them directly; kept here to preserve the module's (n, d_x) API.
    xt = x_eval.T.astype(f32)                    # (d_x, n)

    n_blk = _choose_n_blk(n, n_blk)
    num_blocks = pl.cdiv(n, n_blk)

    # TODO(synk): for long trajectories (T >~ 64) the one-hot interpolation should switch
    # to a two-column gather of (z@w1)^T to avoid O(T) VPU/VMEM cost per block.
    kernel = functools.partial(_decoder_kernel, hidden_dtype=hidden_dtype)

    out_t = pl.pallas_call(
        kernel,
        out_shape=jax.ShapeDtypeStruct((d_u, n), jnp.dtype(out_dtype)),
        grid_spec=pltpu.PrefetchScalarGridSpec(
            num_scalar_prefetch=0,
            grid=(num_blocks,),
            in_specs=[
                pl.BlockSpec((1, n_blk), lambda i: (0, i)),          # streamed t_eval row
                pl.BlockSpec((d_x, n_blk), lambda i: (0, i)),        # streamed x_eval^T slab
                pl.BlockSpec((T, 1), lambda i: (0, 0)),              # resident t
                pl.BlockSpec((T, 1), lambda i: (0, 0)),              # resident 1/dt
                pl.BlockSpec((d_h, T + d_x), lambda i: (0, 0)),      # resident fused weight
                pl.BlockSpec((d_h, 1), lambda i: (0, 0)),            # resident b1
                pl.BlockSpec((d_u, d_h), lambda i: (0, 0)),          # resident w2^T
                pl.BlockSpec((d_u, 1), lambda i: (0, 0)),            # resident b2
            ],
            out_specs=pl.BlockSpec((d_u, n_blk), lambda i: (0, i)),
        ),
        compiler_params=pltpu.CompilerParams(
            dimension_semantics=("parallel",),   # shards blocks across v7x's two TCs
        ),
    )(te_row, xt, t_col, inv_dt, wbig, b1_col, w2_t, b2_col)

    if transposed_output:
        return out_t                 # (d_u, n): fused consumers skip the transpose round trip
    return out_t.T                   # (n, d_u): matches the PyTorch module's contract


def _reference(t_eval, x_eval, t, z, params):
    """Pure-JAX reference for correctness checking."""
    w_space, w1, b1, w2, b2 = params
    z_eval = jax.vmap(lambda col: jnp.interp(t_eval, t, col), in_axes=1, out_axes=1)(z)
    h = z_eval + x_eval @ w_space
    return jnp.tanh(h @ w1 + b1) @ w2 + b2


if __name__ == "__main__":
    # small shapes consistent with forward(): n eval points, `time` trajectory points,
    # spatial dim d_x, latent dim d_z, f = MLP(d_z -> d_h -> d_u)
    n, time_pts, d_x, d_z, d_h, d_u = 1024, 8, 4, 32, 64, 16

    key = jax.random.PRNGKey(0)
    ks = jax.random.split(key, 10)

    # deterministic synthetic parameters (matmul layout: (in_features, out_features))
    w_space = jax.random.normal(ks[0], (d_x, d_z), jnp.float32) / jnp.sqrt(d_x)
    w1 = jax.random.normal(ks[1], (d_z, d_h), jnp.float32) / jnp.sqrt(d_z)
    b1 = jax.random.normal(ks[2], (d_h,), jnp.float32) * 0.1
    w2 = jax.random.normal(ks[3], (d_h, d_u), jnp.float32) / jnp.sqrt(d_h)
    b2 = jax.random.normal(ks[4], (d_u,), jnp.float32) * 0.1
    params = (w_space, w1, b1, w2, b2)

    # trajectory: strictly increasing times, latent states z(t)
    t = jnp.linspace(0.0, 1.0, time_pts, dtype=jnp.float32)
    z = jax.random.normal(ks[5], (time_pts, d_z), jnp.float32)

    # evaluation points (includes values outside [0, 1] to exercise edge clamping)
    t_eval = jax.random.uniform(ks[6], (n,), jnp.float32, minval=-0.1, maxval=1.1)
    x_eval = jax.random.normal(ks[7], (n, d_x), jnp.float32)

    ref = _reference(t_eval, x_eval, t, z, params)

    # default path: auto block size (single block here), f32 everywhere
    out = jax.block_until_ready(continuous_decoder(t_eval, x_eval, t, z, params))
    assert out.shape == (n, d_u)
    err = float(jnp.max(jnp.abs(out - ref)))
    assert jnp.allclose(out, ref, atol=1e-4, rtol=1e-4), f"f32 max abs err {err}"

    # explicit small block -> multi-block 'parallel' grid (exercises pipelining path)
    out_blk = jax.block_until_ready(
        continuous_decoder(t_eval, x_eval, t, z, params, n_blk=256))
    assert jnp.allclose(out_blk, ref, atol=1e-4, rtol=1e-4)

    # larger, non-multiple-of-128 n -> auto block choice, even block count, partial last block
    n2 = 4133
    t_eval2 = jax.random.uniform(ks[8], (n2,), jnp.float32, minval=-0.1, maxval=1.1)
    x_eval2 = jax.random.normal(ks[9], (n2, d_x), jnp.float32)
    ref2 = _reference(t_eval2, x_eval2, t, z, params)
    out2 = jax.block_until_ready(continuous_decoder(t_eval2, x_eval2, t, z, params))
    assert out2.shape == (n2, d_u)
    assert jnp.allclose(out2, ref2, atol=1e-4, rtol=1e-4)

    # opt-in reduced precision: bf16 hidden->w2 matmul + bf16 output, transposed (d_u, n)
    out_bf = jax.block_until_ready(
        continuous_decoder(t_eval, x_eval, t, z, params,
                           hidden_matmul_dtype=jnp.bfloat16, out_dtype=jnp.bfloat16,
                           transposed_output=True))
    assert out_bf.shape == (d_u, n)
    out_bf32 = out_bf.astype(jnp.float32)
    assert bool(jnp.all(jnp.isfinite(out_bf32)))
    assert float(jnp.max(jnp.abs(out_bf32 - ref.T))) < 0.25, "bf16 path diverged"

    # TODO(synk): `interp_method` other than 'linear' (e.g. spline) not implemented.
    print("KERNEL_OK")
</pallas_src>

<mosaic_0001>
module attributes {stable_mosaic.version = 11 : i64} {
  func.func @_decoder_kernel(%arg0: i32, %arg1: memref<1x1024xf32, #tpu.memory_space<vmem>>, %arg2: memref<4x1024xf32, #tpu.memory_space<vmem>>, %arg3: memref<8x1xf32, #tpu.memory_space<vmem>>, %arg4: memref<8x1xf32, #tpu.memory_space<vmem>>, %arg5: memref<64x12xf32, #tpu.memory_space<vmem>>, %arg6: memref<64x1xf32, #tpu.memory_space<vmem>>, %arg7: memref<16x64xf32, #tpu.memory_space<vmem>>, %arg8: memref<16x1xf32, #tpu.memory_space<vmem>>, %arg9: memref<16x1024xf32, #tpu.memory_space<vmem>>) attributes {dimension_semantics = [#tpu.dimension_semantics<parallel>], iteration_bounds = array<i64: 1>, scalar_prefetch = 0 : i64, scratch_operands = 0 : i64, tpu.core_type = #tpu.core_type<tc>, window_params = [{transform_indices = @transform_0, window_bounds = array<i64: 1, 1024>}, {transform_indices = @transform_1, window_bounds = array<i64: 4, 1024>}, {pipeline_mode = #tpu.pipeline_mode<synchronous>, transform_indices = @transform_2, window_bounds = array<i64: 8, 1>}, {pipeline_mode = #tpu.pipeline_mode<synchronous>, transform_indices = @transform_3, window_bounds = array<i64: 8, 1>}, {pipeline_mode = #tpu.pipeline_mode<synchronous>, transform_indices = @transform_4, window_bounds = array<i64: 64, 12>}, {pipeline_mode = #tpu.pipeline_mode<synchronous>, transform_indices = @transform_5, window_bounds = array<i64: 64, 1>}, {pipeline_mode = #tpu.pipeline_mode<synchronous>, transform_indices = @transform_6, window_bounds = array<i64: 16, 64>}, {pipeline_mode = #tpu.pipeline_mode<synchronous>, transform_indices = @transform_7, window_bounds = array<i64: 16, 1>}, {transform_indices = @transform_8, window_bounds = array<i64: 16, 1024>}]} {
    %c0 = arith.constant 0 : index
    %c0_0 = arith.constant 0 : index
    %0 = vector.load %arg1[%c0, %c0_0] : memref<1x1024xf32, #tpu.memory_space<vmem>>, vector<1x1024xf32>
    %c0_1 = arith.constant 0 : index
    %c0_2 = arith.constant 0 : index
    %1 = vector.load %arg2[%c0_1, %c0_2] : memref<4x1024xf32, #tpu.memory_space<vmem>>, vector<4x1024xf32>
    %c0_3 = arith.constant 0 : index
    %c0_4 = arith.constant 0 : index
    %2 = vector.load %arg3[%c0_3, %c0_4] : memref<8x1xf32, #tpu.memory_space<vmem>>, vector<8x1xf32>
    %c0_5 = arith.constant 0 : index
    %c0_6 = arith.constant 0 : index
    %3 = vector.load %arg4[%c0_5, %c0_6] : memref<8x1xf32, #tpu.memory_space<vmem>>, vector<8x1xf32>
    %4 = vector.broadcast %0 : vector<1x1024xf32> to vector<8x1024xf32>
    %5 = vector.broadcast %2 : vector<8x1xf32> to vector<8x1024xf32>
    %6 = arith.cmpf oge, %4, %5 : vector<8x1024xf32>
    %7 = arith.extui %6 : vector<8x1024xi1> to vector<8x1024xi32>
    %cst = arith.constant dense<0> : vector<1024xi32>
    %8 = vector.multi_reduction <add>, %7, %cst [0] : vector<8x1024xi32> to vector<1024xi32>
    %9 = vector.shape_cast %8 : vector<1024xi32> to vector<1x1024xi32>
    %c1_i32 = arith.constant 1 : i32
    %10 = vector.broadcast %c1_i32 : i32 to vector<1x1024xi32>
    %11 = arith.subi %9, %10 : vector<1x1024xi32>
    %c0_i32 = arith.constant 0 : i32
    %c6_i32 = arith.constant 6 : i32
    %12 = vector.broadcast %c0_i32 : i32 to vector<1x1024xi32>
    %13 = arith.maxsi %12, %11 : vector<1x1024xi32>
    %14 = vector.broadcast %c6_i32 : i32 to vector<1x1024xi32>
    %15 = arith.minsi %14, %13 : vector<1x1024xi32>
    %16 = tpu.iota {dimensions = array<i32: 0>} : vector<8x1024xi32>
    %17 = vector.broadcast %15 : vector<1x1024xi32> to vector<8x1024xi32>
    %18 = arith.cmpi eq, %16, %17 : vector<8x1024xi32>
    %c1_i32_7 = arith.constant 1 : i32
    %19 = vector.broadcast %c1_i32_7 : i32 to vector<1x1024xi32>
    %20 = arith.addi %15, %19 : vector<1x1024xi32>
    %21 = vector.broadcast %20 : vector<1x1024xi32> to vector<8x1024xi32>
    %22 = arith.cmpi eq, %16, %21 : vector<8x1024xi32>
    %cst_8 = arith.constant 0.000000e+00 : f32
    %23 = vector.shape_cast %2 : vector<8x1xf32> to vector<8x1xf32>
    %24 = vector.broadcast %23 : vector<8x1xf32> to vector<8x1024xf32>
    %25 = vector.broadcast %cst_8 : f32 to vector<8x1024xf32>
    %26 = arith.select %18, %24, %25 : vector<8x1024xi1>, vector<8x1024xf32>
    %cst_9 = arith.constant dense<0.000000e+00> : vector<1024xf32>
    %27 = vector.multi_reduction <add>, %26, %cst_9 [0] : vector<8x1024xf32> to vector<1024xf32>
    %28 = vector.shape_cast %27 : vector<1024xf32> to vector<1x1024xf32>
    %cst_10 = arith.constant 0.000000e+00 : f32
    %29 = vector.shape_cast %3 : vector<8x1xf32> to vector<8x1xf32>
    %30 = vector.broadcast %29 : vector<8x1xf32> to vector<8x1024xf32>
    %31 = vector.broadcast %cst_10 : f32 to vector<8x1024xf32>
    %32 = arith.select %18, %30, %31 : vector<8x1024xi1>, vector<8x1024xf32>
    %cst_11 = arith.constant dense<0.000000e+00> : vector<1024xf32>
    %33 = vector.multi_reduction <add>, %32, %cst_11 [0] : vector<8x1024xf32> to vector<1024xf32>
    %34 = vector.shape_cast %33 : vector<1024xf32> to vector<1x1024xf32>
    %35 = arith.subf %0, %28 : vector<1x1024xf32>
    %36 = arith.mulf %35, %34 : vector<1x1024xf32>
    %cst_12 = arith.constant 0.000000e+00 : f32
    %cst_13 = arith.constant 1.000000e+00 : f32
    %37 = vector.broadcast %cst_12 : f32 to vector<1x1024xf32>
    %38 = arith.maximumf %37, %36 : vector<1x1024xf32>
    %39 = vector.broadcast %cst_13 : f32 to vector<1x1024xf32>
    %40 = arith.minimumf %39, %38 : vector<1x1024xf32>
    %cst_14 = arith.constant 1.000000e+00 : f32
    %41 = vector.broadcast %cst_14 : f32 to vector<1x1024xf32>
    %42 = arith.subf %41, %40 : vector<1x1024xf32>
    %cst_15 = arith.constant 0.000000e+00 : f32
    %43 = vector.shape_cast %42 : vector<1x1024xf32> to vector<1x1024xf32>
    %44 = vector.broadcast %43 : vector<1x1024xf32> to vector<8x1024xf32>
    %45 = vector.broadcast %cst_15 : f32 to vector<8x1024xf32>
    %46 = arith.select %18, %44, %45 : vector<8x1024xi1>, vector<8x1024xf32>
    %cst_16 = arith.constant 0.000000e+00 : f32
    %47 = vector.shape_cast %40 : vector<1x1024xf32> to vector<1x1024xf32>
    %48 = vector.broadcast %47 : vector<1x1024xf32> to vector<8x1024xf32>
    %49 = vector.broadcast %cst_16 : f32 to vector<8x1024xf32>
    %50 = arith.select %22, %48, %49 : vector<8x1024xi1>, vector<8x1024xf32>
    %51 = arith.addf %46, %50 : vector<8x1024xf32>
    %52 = tpu.concatenate %51, %1 in 0 : vector<8x1024xf32>, vector<4x1024xf32> -> vector<12x1024xf32>
    %c0_17 = arith.constant 0 : index
    %c0_18 = arith.constant 0 : index
    %53 = vector.load %arg5[%c0_17, %c0_18] : memref<64x12xf32, #tpu.memory_space<vmem>>, vector<64x12xf32>
    %cst_19 = arith.constant dense<0.000000e+00> : vector<64x1024xf32>
    %54 = tpu.matmul %53, %52, %cst_19 {dimension_numbers = #tpu.dot_dimension_numbers<[1], [0], [0], [1], [0, 0, 1, 1], [], []>} : vector<64x12xf32>, vector<12x1024xf32>, vector<64x1024xf32> -> vector<64x1024xf32>
    %c0_20 = arith.constant 0 : index
    %c0_21 = arith.constant 0 : index
    %55 = vector.load %arg6[%c0_20, %c0_21] : memref<64x1xf32, #tpu.memory_space<vmem>>, vector<64x1xf32>
    %56 = vector.broadcast %55 : vector<64x1xf32> to vector<64x1024xf32>
    %57 = arith.addf %54, %56 : vector<64x1024xf32>
    %58 = math.tanh %57 : vector<64x1024xf32>
    %c0_22 = arith.constant 0 : index
    %c0_23 = arith.constant 0 : index
    %59 = vector.load %arg7[%c0_22, %c0_23] : memref<16x64xf32, #tpu.memory_space<vmem>>, vector<16x64xf32>
    %cst_24 = arith.constant dense<0.000000e+00> : vector<16x1024xf32>
    %60 = tpu.matmul %59, %58, %cst_24 {dimension_numbers = #tpu.dot_dimension_numbers<[1], [0], [0], [1], [0, 0, 1, 1], [], []>} : vector<16x64xf32>, vector<64x1024xf32>, vector<16x1024xf32> -> vector<16x1024xf32>
    %c0_25 = arith.constant 0 : index
    %c0_26 = arith.constant 0 : index
    %61 = vector.load %arg8[%c0_25, %c0_26] : memref<16x1xf32, #tpu.memory_space<vmem>>, vector<16x1xf32>
    %62 = vector.broadcast %61 : vector<16x1xf32> to vector<16x1024xf32>
    %63 = arith.addf %60, %62 : vector<16x1024xf32>
    %c0_27 = arith.constant 0 : index
    %c0_28 = arith.constant 0 : index
    %64 = vector.load %arg9[%c0_27, %c0_28] : memref<16x1024xf32, #tpu.memory_space<vmem>>, vector<16x1024xf32>
    tpu.vector_store %arg9[%c0_27, %c0_28], %63 {strides = array<i32>} : memref<16x1024xf32, #tpu.memory_space<vmem>>, vector<16x1024xf32>,
    return
  }
  func.func @transform_0(%arg0: i32) -> (i32, i32) {
    %c0_i32 = arith.constant 0 : i32
    %c0_i32_0 = arith.constant 0 : i32
    return %c0_i32, %arg0 : i32, i32
  }
  func.func @transform_1(%arg0: i32) -> (i32, i32) {
    %c0_i32 = arith.constant 0 : i32
    %c0_i32_0 = arith.constant 0 : i32
    return %c0_i32, %arg0 : i32, i32
  }
  func.func @transform_2(%arg0: i32) -> (i32, i32) {
    %c0_i32 = arith.constant 0 : i32
    %c0_i32_0 = arith.constant 0 : i32
    %c0_i32_1 = arith.constant 0 : i32
    return %c0_i32, %c0_i32_0 : i32, i32
  }
  func.func @transform_3(%arg0: i32) -> (i32, i32) {
    %c0_i32 = arith.constant 0 : i32
    %c0_i32_0 = arith.constant 0 : i32
    %c0_i32_1 = arith.constant 0 : i32
    return %c0_i32, %c0_i32_0 : i32, i32
  }
  func.func @transform_4(%arg0: i32) -> (i32, i32) {
    %c0_i32 = arith.constant 0 : i32
    %c0_i32_0 = arith.constant 0 : i32
    %c0_i32_1 = arith.constant 0 : i32
    return %c0_i32, %c0_i32_0 : i32, i32
  }
  func.func @transform_5(%arg0: i32) -> (i32, i32) {
    %c0_i32 = arith.constant 0 : i32
    %c0_i32_0 = arith.constant 0 : i32
    %c0_i32_1 = arith.constant 0 : i32
    return %c0_i32, %c0_i32_0 : i32, i32
  }
  func.func @transform_6(%arg0: i32) -> (i32, i32) {
    %c0_i32 = arith.constant 0 : i32
    %c0_i32_0 = arith.constant 0 : i32
    %c0_i32_1 = arith.constant 0 : i32
    return %c0_i32, %c0_i32_0 : i32, i32
  }
  func.func @transform_7(%arg0: i32) -> (i32, i32) {
    %c0_i32 = arith.constant 0 : i32
    %c0_i32_0 = arith.constant 0 : i32
    %c0_i32_1 = arith.constant 0 : i32
    return %c0_i32, %c0_i32_0 : i32, i32
  }
  func.func @transform_8(%arg0: i32) -> (i32, i32) {
    %c0_i32 = arith.constant 0 : i32
    %c0_i32_0 = arith.constant 0 : i32
    return %c0_i32, %arg0 : i32, i32
  }
}

</mosaic_0001>

<llo_original>
// kernel: tpu_custom_call.1
$region0: #{tpu_custom_call.1}
  #allocation0 [shape = 'u32[]', space=smem, size = 0x4, offset = 0x4, fixed_abs, tag = 'smem constant byte address 0x4 - core index']
  #allocation1 [shape = 'u32[144,128]{1,0:T(1,128)}', space=vmem, size = 0x12000, scoped, tag = 'internal scratch']
  %s0 = inlined_call_operand.vmem [shape: f32[1,1024], index: 0, kind: input, shape index: {}]
  %s1 = inlined_call_operand.vmem [shape: f32[4,1024], index: 1, kind: input, shape index: {}]
  %s2 = inlined_call_operand.vmem [shape: f32[8,1], index: 2, kind: input, shape index: {}]
  %s3 = inlined_call_operand.vmem [shape: f32[8,1], index: 3, kind: input, shape index: {}]
  %s4 = inlined_call_operand.vmem [shape: f32[64,12], index: 4, kind: input, shape index: {}]
  %s5 = inlined_call_operand.vmem [shape: f32[64,1], index: 5, kind: input, shape index: {}]
  %s6 = inlined_call_operand.vmem [shape: f32[16,64], index: 6, kind: input, shape index: {}]
  %s7 = inlined_call_operand.vmem [shape: f32[16,1], index: 7, kind: input, shape index: {}]
  %s8 = inlined_call_operand.hbm [shape: f32[16,1024], index: 8, kind: output, shape index: {}]
  %s9 = sld [smem:[#allocation0]]
  $region42: #{tpu_custom_call.1} parent=0
    _
  %s11 = ssub.s32 1, %s9
  %s12 = scalar_select 0, %s11, %s9
  $region1: #{tpu_custom_call.1} parent=0
    #allocation2 [shape = 'u8[65536]{0}', space=vmem, size = 0x10000, scoped, tag = 'output window, operand 0, single buffered']
    #allocation3 [shape = 's32[1]{0}', space=sflag, size = 0x4, scoped, tag = 'scoped memory for tpu_custom_call.1']
    %13 = vsyncpa [#allocation3], 0
    // Predicated region
    $region2: #{tpu_custom_call.1} parent=1 // pred_check
      _
    $region3: #{tpu_custom_call.1} parent=1 // pred_check_branch
      %15 = sbr.rel (0) target = $region5
    $region4: #{tpu_custom_call.1} parent=1 // pred_region
      _
    $region5: #{tpu_custom_call.1} parent=1 // pred_fallthru
      _
    // Predicated region
    $region6: #{tpu_custom_call.1} parent=1 // pred_check
      _
    $region7: #{tpu_custom_call.1} parent=1 // pred_check_branch
      %17 = sbr.rel (0) target = $region9
    $region8: #{tpu_custom_call.1} parent=1 // pred_region
      _
    $region9: #{tpu_custom_call.1} parent=1 // pred_fallthru
      _
    // Predicated region
    $region10: #{tpu_custom_call.1} parent=1 // pred_check
      _
    $region11: #{tpu_custom_call.1} parent=1 // pred_check_branch
      %19 = sbr.rel (0) target = $region13
    $region12: #{tpu_custom_call.1} parent=1 // pred_region
      _
    $region13: #{tpu_custom_call.1} parent=1 // pred_fallthru
      _
    // Predicated region
    $region14: #{tpu_custom_call.1} parent=1 // pred_check
      _
    $region15: #{tpu_custom_call.1} parent=1 // pred_check_branch
      %21 = sbr.rel (0) target = $region17
    $region16: #{tpu_custom_call.1} parent=1 // pred_region
      _
    $region17: #{tpu_custom_call.1} parent=1 // pred_fallthru
      _
    // Predicated region
    $region18: #{tpu_custom_call.1} parent=1 // pred_check
      _
    $region19: #{tpu_custom_call.1} parent=1 // pred_check_branch
      %23 = sbr.rel (0) target = $region21
    $region20: #{tpu_custom_call.1} parent=1 // pred_region
      _
    $region21: #{tpu_custom_call.1} parent=1 // pred_fallthru
      _
    // Predicated region
    $region22: #{tpu_custom_call.1} parent=1 // pred_check
      _
    $region23: #{tpu_custom_call.1} parent=1 // pred_check_branch
      %25 = sbr.rel (0) target = $region25
    $region24: #{tpu_custom_call.1} parent=1 // pred_region
      _
    $region25: #{tpu_custom_call.1} parent=1 // pred_fallthru
      _
    // Predicated region
    $region26: #{tpu_custom_call.1} parent=1 // pred_check
      _
    $region27: #{tpu_custom_call.1} parent=1 // pred_check_branch
      %27 = sbr.rel (0) target = $region29
    $region28: #{tpu_custom_call.1} parent=1 // pred_region
      _
    $region29: #{tpu_custom_call.1} parent=1 // pred_fallthru
      _
    // Predicated region
    $region30: #{tpu_custom_call.1} parent=1 // pred_check
      _
    $region31: #{tpu_custom_call.1} parent=1 // pred_check_branch
      %29 = sbr.rel (0) target = $region33
    $region32: #{tpu_custom_call.1} parent=1 // pred_region
      _
    $region33: #{tpu_custom_call.1} parent=1 // pred_fallthru
      _
    %v30 = vld [vmem:[%s0] sm:$0xff]
    %v31 = vld [vmem:[%s1] sm:$0xff]
    %v32 = vld [vmem:[%s1 + $0x8] sm:$0xff]
    %v33 = vld [vmem:[%s1 + $0x10] sm:$0xff]
    %v34 = vld [vmem:[%s1 + $0x18] sm:$0xff]
    %v35 = vld [vmem:[%s2] sm:$0xff]
    %v36 = vld [vmem:[%s3] sm:$0xff]
    %v38 = vlaneseq
    %v39 = vshrl.u32 %v38, 7
    %v40 = vsub.s32 0, %v39
    %v41 = vrot.slane %v30, %v40
    %v42 = vlaneseq
    %v43 = vshrl.u32 %v42, 7
    %v44 = vsub.s32 1, %v43
    %v45 = vrot.slane %v30, %v44
    %v46 = vlaneseq
    %v47 = vshrl.u32 %v46, 7
    %v48 = vsub.s32 2, %v47
    %v49 = vrot.slane %v30, %v48
    %v50 = vlaneseq
    %v51 = vshrl.u32 %v50, 7
    %v52 = vsub.s32 3, %v51
    %v53 = vrot.slane %v30, %v52
    %v54 = vlaneseq
    %v55 = vshrl.u32 %v54, 7
    %v56 = vsub.s32 4, %v55
    %v57 = vrot.slane %v30, %v56
    %v58 = vlaneseq
    %v59 = vshrl.u32 %v58, 7
    %v60 = vsub.s32 5, %v59
    %v61 = vrot.slane %v30, %v60
    %v62 = vlaneseq
    %v63 = vshrl.u32 %v62, 7
    %v64 = vsub.s32 6, %v63
    %v65 = vrot.slane %v30, %v64
    %v66 = vlaneseq
    %v67 = vshrl.u32 %v66, 7
    %v68 = vsub.s32 7, %v67
    %v69 = vrot.slane %v30, %v68
    %79 = vset.pattern.permute.xlu0 0
    %80 = vperm.xlu0 %79, %v35
    %v81 = vpop.permute.xlu0 %80
    %vm83 = vcmp.ge.f32.partialorder %v41, %v81
    %vm84 = vcmp.ge.f32.partialorder %v45, %v81
    %vm85 = vcmp.ge.f32.partialorder %v49, %v81
    %vm86 = vcmp.ge.f32.partialorder %v53, %v81
    %vm87 = vcmp.ge.f32.partialorder %v57, %v81
    %vm88 = vcmp.ge.f32.partialorder %v61, %v81
    %vm89 = vcmp.ge.f32.partialorder %v65, %v81
    %vm90 = vcmp.ge.f32.partialorder %v69, %v81
    %v91 = vsel %vm83, 1, 0
    %v92 = vsel %vm84, 1, 0
    %v93 = vsel %vm85, 1, 0
    %v94 = vsel %vm86, 1, 0
    %v95 = vsel %vm87, 1, 0
    %v96 = vsel %vm88, 1, 0
    %v97 = vsel %vm89, 1, 0
    %v98 = vsel %vm90, 1, 0
    %v99 = vrot.slane %v91, 4
    %v100 = vadd.s32 %v91, %v99
    %v101 = vrot.slane %v100, 2
    %v102 = vadd.s32 %v100, %v101
    %v103 = vrot.slane %v102, 1
    %v104 = vadd.s32 %v102, %v103
    %v105 = vrot.slane %v92, 4
    %v106 = vadd.s32 %v92, %v105
    %v107 = vrot.slane %v106, 2
    %v108 = vadd.s32 %v106, %v107
    %v109 = vrot.slane %v108, 1
    %v110 = vadd.s32 %v108, %v109
    %v111 = vrot.slane %v93, 4
    %v112 = vadd.s32 %v93, %v111
    %v113 = vrot.slane %v112, 2
    %v114 = vadd.s32 %v112, %v113
    %v115 = vrot.slane %v114, 1
    %v116 = vadd.s32 %v114, %v115
    %v117 = vrot.slane %v94, 4
    %v118 = vadd.s32 %v94, %v117
    %v119 = vrot.slane %v118, 2
    %v120 = vadd.s32 %v118, %v119
    %v121 = vrot.slane %v120, 1
    %v122 = vadd.s32 %v120, %v121
    %v123 = vrot.slane %v95, 4
    %v124 = vadd.s32 %v95, %v123
    %v125 = vrot.slane %v124, 2
    %v126 = vadd.s32 %v124, %v125
    %v127 = vrot.slane %v126, 1
    %v128 = vadd.s32 %v126, %v127
    %v129 = vrot.slane %v96, 4
    %v130 = vadd.s32 %v96, %v129
    %v131 = vrot.slane %v130, 2
    %v132 = vadd.s32 %v130, %v131
    %v133 = vrot.slane %v132, 1
    %v134 = vadd.s32 %v132, %v133
    %v135 = vrot.slane %v97, 4
    %v136 = vadd.s32 %v97, %v135
    %v137 = vrot.slane %v136, 2
    %v138 = vadd.s32 %v136, %v137
    %v139 = vrot.slane %v138, 1
    %v140 = vadd.s32 %v138, %v139
    %v141 = vrot.slane %v98, 4
    %v142 = vadd.s32 %v98, %v141
    %v143 = vrot.slane %v142, 2
    %v144 = vadd.s32 %v142, %v143
    %v145 = vrot.slane %v144, 1
    %v146 = vadd.s32 %v144, %v145
    %v147 = vsub.s32 %v104, 1
    %v148 = vsub.s32 %v110, 1
    %v149 = vsub.s32 %v116, 1
    %v150 = vsub.s32 %v122, 1
    %v151 = vsub.s32 %v128, 1
    %v152 = vsub.s32 %v134, 1
    %v153 = vsub.s32 %v140, 1
    %v154 = vsub.s32 %v146, 1
    %vm155 = vcmp.gt.s32.totalorder %v147, 0
    %v156 = vsel %vm155, %v147, 0
    %vm157 = vcmp.gt.s32.totalorder %v148, 0
    %v158 = vsel %vm157, %v148, 0
    %vm159 = vcmp.gt.s32.totalorder %v149, 0
    %v160 = vsel %vm159, %v149, 0
    %vm161 = vcmp.gt.s32.totalorder %v150, 0
    %v162 = vsel %vm161, %v150, 0
    %vm163 = vcmp.gt.s32.totalorder %v151, 0
    %v164 = vsel %vm163, %v151, 0
    %vm165 = vcmp.gt.s32.totalorder %v152, 0
    %v166 = vsel %vm165, %v152, 0
    %vm167 = vcmp.gt.s32.totalorder %v153, 0
    %v168 = vsel %vm167, %v153, 0
    %vm169 = vcmp.gt.s32.totalorder %v154, 0
    %v170 = vsel %vm169, %v154, 0
    %vm171 = vcmp.lt.s32.totalorder %v156, 6
    %v172 = vsel %vm171, %v156, 6
    %vm173 = vcmp.lt.s32.totalorder %v158, 6
    %v174 = vsel %vm173, %v158, 6
    %vm175 = vcmp.lt.s32.totalorder %v160, 6
    %v176 = vsel %vm175, %v160, 6
    %vm177 = vcmp.lt.s32.totalorder %v162, 6
    %v178 = vsel %vm177, %v162, 6
    %vm179 = vcmp.lt.s32.totalorder %v164, 6
    %v180 = vsel %vm179, %v164, 6
    %vm181 = vcmp.lt.s32.totalorder %v166, 6
    %v182 = vsel %vm181, %v166, 6
    %vm183 = vcmp.lt.s32.totalorder %v168, 6
    %v184 = vsel %vm183, %v168, 6
    %vm185 = vcmp.lt.s32.totalorder %v170, 6
    %v186 = vsel %vm185, %v170, 6
    %v187 = vlaneseq
    %v188 = vshrl.u32 %v187, 7
    %vm189 = vcmp.eq.s32.totalorder %v188, %v172
    %vm190 = vcmp.eq.s32.totalorder %v188, %v174
    %vm191 = vcmp.eq.s32.totalorder %v188, %v176
    %vm192 = vcmp.eq.s32.totalorder %v188, %v178
    %vm193 = vcmp.eq.s32.totalorder %v188, %v180
    %vm194 = vcmp.eq.s32.totalorder %v188, %v182
    %vm195 = vcmp.eq.s32.totalorder %v188, %v184
    %vm196 = vcmp.eq.s32.totalorder %v188, %v186
    %v197 = vadd.s32 %v172, 1
    %v198 = vadd.s32 %v174, 1
    %v199 = vadd.s32 %v176, 1
    %v200 = vadd.s32 %v178, 1
    %v201 = vadd.s32 %v180, 1
    %v202 = vadd.s32 %v182, 1
    %v203 = vadd.s32 %v184, 1
    %v204 = vadd.s32 %v186, 1
    %vm205 = vcmp.eq.s32.totalorder %v188, %v197
    %vm206 = vcmp.eq.s32.totalorder %v188, %v198
    %vm207 = vcmp.eq.s32.totalorder %v188, %v199
    %vm208 = vcmp.eq.s32.totalorder %v188, %v200
    %vm209 = vcmp.eq.s32.totalorder %v188, %v201
    %vm210 = vcmp.eq.s32.totalorder %v188, %v202
    %vm211 = vcmp.eq.s32.totalorder %v188, %v203
    %vm212 = vcmp.eq.s32.totalorder %v188, %v204
    %v213 = vsel %vm189, %v81, 0.0
    %v214 = vsel %vm190, %v81, 0.0
    %v215 = vsel %vm191, %v81, 0.0
    %v216 = vsel %vm192, %v81, 0.0
    %v217 = vsel %vm193, %v81, 0.0
    %v218 = vsel %vm194, %v81, 0.0
    %v219 = vsel %vm195, %v81, 0.0
    %v220 = vsel %vm196, %v81, 0.0
    %v221 = vrot.slane %v213, 4
    %v222 = vadd.f32 %v213, %v221
    %v223 = vrot.slane %v222, 2
    %v224 = vadd.f32 %v222, %v223
    %v225 = vrot.slane %v224, 1
    %v226 = vadd.f32 %v224, %v225
    %v227 = vrot.slane %v214, 4
    %v228 = vadd.f32 %v214, %v227
    %v229 = vrot.slane %v228, 2
    %v230 = vadd.f32 %v228, %v229
    %v231 = vrot.slane %v230, 1
    %v232 = vadd.f32 %v230, %v231
    %v233 = vrot.slane %v215, 4
    %v234 = vadd.f32 %v215, %v233
    %v235 = vrot.slane %v234, 2
    %v236 = vadd.f32 %v234, %v235
    %v237 = vrot.slane %v236, 1
    %v238 = vadd.f32 %v236, %v237
    %v239 = vrot.slane %v216, 4
    %v240 = vadd.f32 %v216, %v239
    %v241 = vrot.slane %v240, 2
    %v242 = vadd.f32 %v240, %v241
    %v243 = vrot.slane %v242, 1
    %v244 = vadd.f32 %v242, %v243
    %v245 = vrot.slane %v217, 4
    %v246 = vadd.f32 %v217, %v245
    %v247 = vrot.slane %v246, 2
    %v248 = vadd.f32 %v246, %v247
    %v249 = vrot.slane %v248, 1
    %v250 = vadd.f32 %v248, %v249
    %v251 = vrot.slane %v218, 4
    %v252 = vadd.f32 %v218, %v251
    %v253 = vrot.slane %v252, 2
    %v254 = vadd.f32 %v252, %v253
    %v255 = vrot.slane %v254, 1
    %v256 = vadd.f32 %v254, %v255
    %v257 = vrot.slane %v219, 4
    %v258 = vadd.f32 %v219, %v257
    %v259 = vrot.slane %v258, 2
    %v260 = vadd.f32 %v258, %v259
    %v261 = vrot.slane %v260, 1
    %v262 = vadd.f32 %v260, %v261
    %v263 = vrot.slane %v220, 4
    %v264 = vadd.f32 %v220, %v263
    %v265 = vrot.slane %v264, 2
    %v266 = vadd.f32 %v264, %v265
    %v267 = vrot.slane %v266, 1
    %v268 = vadd.f32 %v266, %v267
    %270 = vset.pattern.permute.xlu0 0
    %271 = vperm.xlu0 %270, %v36
    %v272 = vpop.permute.xlu0 %271
    %v274 = vsel %vm189, %v272, 0.0
    %v275 = vsel %vm190, %v272, 0.0
    %v276 = vsel %vm191, %v272, 0.0
    %v277 = vsel %vm192, %v272, 0.0
    %v278 = vsel %vm193, %v272, 0.0
    %v279 = vsel %vm194, %v272, 0.0
    %v280 = vsel %vm195, %v272, 0.0
    %v281 = vsel %vm196, %v272, 0.0
    %v282 = vrot.slane %v274, 4
    %v283 = vadd.f32 %v274, %v282
    %v284 = vrot.slane %v283, 2
    %v285 = vadd.f32 %v283, %v284
    %v286 = vrot.slane %v285, 1
    %v287 = vadd.f32 %v285, %v286
    %v288 = vrot.slane %v275, 4
    %v289 = vadd.f32 %v275, %v288
    %v290 = vrot.slane %v289, 2
    %v291 = vadd.f32 %v289, %v290
    %v292 = vrot.slane %v291, 1
    %v293 = vadd.f32 %v291, %v292
    %v294 = vrot.slane %v276, 4
    %v295 = vadd.f32 %v276, %v294
    %v296 = vrot.slane %v295, 2
    %v297 = vadd.f32 %v295, %v296
    %v298 = vrot.slane %v297, 1
    %v299 = vadd.f32 %v297, %v298
    %v300 = vrot.slane %v277, 4
    %v301 = vadd.f32 %v277, %v300
    %v302 = vrot.slane %v301, 2
    %v303 = vadd.f32 %v301, %v302
    %v304 = vrot.slane %v303, 1
    %v305 = vadd.f32 %v303, %v304
    %v306 = vrot.slane %v278, 4
    %v307 = vadd.f32 %v278, %v306
    %v308 = vrot.slane %v307, 2
    %v309 = vadd.f32 %v307, %v308
    %v310 = vrot.slane %v309, 1
    %v311 = vadd.f32 %v309, %v310
    %v312 = vrot.slane %v279, 4
    %v313 = vadd.f32 %v279, %v312
    %v314 = vrot.slane %v313, 2
    %v315 = vadd.f32 %v313, %v314
    %v316 = vrot.slane %v315, 1
    %v317 = vadd.f32 %v315, %v316
    %v318 = vrot.slane %v280, 4
    %v319 = vadd.f32 %v280, %v318
    %v320 = vrot.slane %v319, 2
    %v321 = vadd.f32 %v319, %v320
    %v322 = vrot.slane %v321, 1
    %v323 = vadd.f32 %v321, %v322
    %v324 = vrot.slane %v281, 4
    %v325 = vadd.f32 %v281, %v324
    %v326 = vrot.slane %v325, 2
    %v327 = vadd.f32 %v325, %v326
    %v328 = vrot.slane %v327, 1
    %v329 = vadd.f32 %v327, %v328
    %v338 = vcombine.low %v226, %v232
    %v339 = vcombine.low %v238, %v244
    %v340 = vcombine.low %v250, %v256
    %v341 = vcombine.low %v262, %v268
    %v343 = vunpack.c.l.s4 1966171168
    %v344 = vunpack.c.0.s8 %v343
    %v345 = vlaneseq
    %v346 = vshrl.u32 %v345, 7
    %v347 = vsub.s32 %v344, %v346
    %v348 = vrot.slane %v338, %v347
    %v350 = vunpack.c.l.s4 1966171168
    %v351 = vunpack.c.0.s8 %v350
    %v352 = vlaneseq
    %v353 = vshrl.u32 %v352, 7
    %v354 = vsub.s32 %v351, %v353
    %v355 = vrot.slane %v339, %v354
    %v357 = vunpack.c.l.s4 1966171168
    %v358 = vunpack.c.0.s8 %v357
    %v359 = vlaneseq
    %v360 = vshrl.u32 %v359, 7
    %v361 = vsub.s32 %v358, %v360
    %v362 = vrot.slane %v340, %v361
    %v364 = vunpack.c.l.s4 1966171168
    %v365 = vunpack.c.0.s8 %v364
    %v366 = vlaneseq
    %v367 = vshrl.u32 %v366, 7
    %v368 = vsub.s32 %v365, %v367
    %v369 = vrot.slane %v341, %v368
    %v370 = vcombine.low %v348, %v355
    %v371 = vcombine.low %v362, %v369
    %v373 = vunpack.c.l.s4 1966171168
    %v374 = vunpack.c.0.s8 %v373
    %v375 = vlaneseq
    %v376 = vshrl.u32 %v375, 7
    %v377 = vsub.s32 %v374, %v376
    %v378 = vrot.slane %v370, %v377
    %v380 = vunpack.c.l.s4 1966171168
    %v381 = vunpack.c.0.s8 %v380
    %v382 = vlaneseq
    %v383 = vshrl.u32 %v382, 7
    %v384 = vsub.s32 %v381, %v383
    %v385 = vrot.slane %v371, %v384
    %v386 = vcombine.low %v378, %v385
    %v388 = vsub.f32 %v30, %v386
    %v397 = vcombine.low %v287, %v293
    %v398 = vcombine.low %v299, %v305
    %v399 = vcombine.low %v311, %v317
    %v400 = vcombine.low %v323, %v329
    %v402 = vunpack.c.l.s4 1966171168
    %v403 = vunpack.c.0.s8 %v402
    %v404 = vlaneseq
    %v405 = vshrl.u32 %v404, 7
    %v406 = vsub.s32 %v403, %v405
    %v407 = vrot.slane %v397, %v406
    %v409 = vunpack.c.l.s4 1966171168
    %v410 = vunpack.c.0.s8 %v409
    %v411 = vlaneseq
    %v412 = vshrl.u32 %v411, 7
    %v413 = vsub.s32 %v410, %v412
    %v414 = vrot.slane %v398, %v413
    %v416 = vunpack.c.l.s4 1966171168
    %v417 = vunpack.c.0.s8 %v416
    %v418 = vlaneseq
    %v419 = vshrl.u32 %v418, 7
    %v420 = vsub.s32 %v417, %v419
    %v421 = vrot.slane %v399, %v420
    %v423 = vunpack.c.l.s4 1966171168
    %v424 = vunpack.c.0.s8 %v423
    %v425 = vlaneseq
    %v426 = vshrl.u32 %v425, 7
    %v427 = vsub.s32 %v424, %v426
    %v428 = vrot.slane %v400, %v427
    %v429 = vcombine.low %v407, %v414
    %v430 = vcombine.low %v421, %v428
    %v432 = vunpack.c.l.s4 1966171168
    %v433 = vunpack.c.0.s8 %v432
    %v434 = vlaneseq
    %v435 = vshrl.u32 %v434, 7
    %v436 = vsub.s32 %v433, %v435
    %v437 = vrot.slane %v429, %v436
    %v439 = vunpack.c.l.s4 1966171168
    %v440 = vunpack.c.0.s8 %v439
    %v441 = vlaneseq
    %v442 = vshrl.u32 %v441, 7
    %v443 = vsub.s32 %v440, %v442
    %v444 = vrot.slane %v430, %v443
    %v445 = vcombine.low %v437, %v444
    %v447 = vmul.f32 %v388, %v445
    %v448 = vmax.f32 %v447, 0.0
    %v449 = vmin.f32 %v448, 1.0
    %v450 = vsub.f32 1.0, %v449
    %v452 = vlaneseq
    %v453 = vshrl.u32 %v452, 7
    %v454 = vsub.s32 0, %v453
    %v455 = vrot.slane %v450, %v454
    %v456 = vlaneseq
    %v457 = vshrl.u32 %v456, 7
    %v458 = vsub.s32 1, %v457
    %v459 = vrot.slane %v450, %v458
    %v460 = vlaneseq
    %v461 = vshrl.u32 %v460, 7
    %v462 = vsub.s32 2, %v461
    %v463 = vrot.slane %v450, %v462
    %v464 = vlaneseq
    %v465 = vshrl.u32 %v464, 7
    %v466 = vsub.s32 3, %v465
    %v467 = vrot.slane %v450, %v466
    %v468 = vlaneseq
    %v469 = vshrl.u32 %v468, 7
    %v470 = vsub.s32 4, %v469
    %v471 = vrot.slane %v450, %v470
    %v472 = vlaneseq
    %v473 = vshrl.u32 %v472, 7
    %v474 = vsub.s32 5, %v473
    %v475 = vrot.slane %v450, %v474
    %v476 = vlaneseq
    %v477 = vshrl.u32 %v476, 7
    %v478 = vsub.s32 6, %v477
    %v479 = vrot.slane %v450, %v478
    %v480 = vlaneseq
    %v481 = vshrl.u32 %v480, 7
    %v482 = vsub.s32 7, %v481
    %v483 = vrot.slane %v450, %v482
    %v492 = vsel %vm189, %v455, 0.0
    %v493 = vsel %vm190, %v459, 0.0
    %v494 = vsel %vm191, %v463, 0.0
    %v495 = vsel %vm192, %v467, 0.0
    %v496 = vsel %vm193, %v471, 0.0
    %v497 = vsel %vm194, %v475, 0.0
    %v498 = vsel %vm195, %v479, 0.0
    %v499 = vsel %vm196, %v483, 0.0
    %v501 = vlaneseq
    %v502 = vshrl.u32 %v501, 7
    %v503 = vsub.s32 0, %v502
    %v504 = vrot.slane %v449, %v503
    %v505 = vlaneseq
    %v506 = vshrl.u32 %v505, 7
    %v507 = vsub.s32 1, %v506
    %v508 = vrot.slane %v449, %v507
    %v509 = vlaneseq
    %v510 = vshrl.u32 %v509, 7
    %v511 = vsub.s32 2, %v510
    %v512 = vrot.slane %v449, %v511
    %v513 = vlaneseq
    %v514 = vshrl.u32 %v513, 7
    %v515 = vsub.s32 3, %v514
    %v516 = vrot.slane %v449, %v515
    %v517 = vlaneseq
    %v518 = vshrl.u32 %v517, 7
    %v519 = vsub.s32 4, %v518
    %v520 = vrot.slane %v449, %v519
    %v521 = vlaneseq
    %v522 = vshrl.u32 %v521, 7
    %v523 = vsub.s32 5, %v522
    %v524 = vrot.slane %v449, %v523
    %v525 = vlaneseq
    %v526 = vshrl.u32 %v525, 7
    %v527 = vsub.s32 6, %v526
    %v528 = vrot.slane %v449, %v527
    %v529 = vlaneseq
    %v530 = vshrl.u32 %v529, 7
    %v531 = vsub.s32 7, %v530
    %v532 = vrot.slane %v449, %v531
    %v541 = vsel %vm205, %v504, 0.0
    %v542 = vsel %vm206, %v508, 0.0
    %v543 = vsel %vm207, %v512, 0.0
    %v544 = vsel %vm208, %v516, 0.0
    %v545 = vsel %vm209, %v520, 0.0
    %v546 = vsel %vm210, %v524, 0.0
    %v547 = vsel %vm211, %v528, 0.0
    %v548 = vsel %vm212, %v532, 0.0
    %v549 = vadd.f32 %v492, %v541
    %v550 = vadd.f32 %v493, %v542
    %v551 = vadd.f32 %v494, %v543
    %v552 = vadd.f32 %v495, %v544
    %v553 = vadd.f32 %v496, %v545
    %v554 = vadd.f32 %v497, %v546
    %v555 = vadd.f32 %v498, %v547
    %v556 = vadd.f32 %v499, %v548
    %v561 = vcombine.high %v31, %v31
    %v562 = vcombine.high %v32, %v32
    %v563 = vcombine.high %v33, %v33
    %v564 = vcombine.high %v34, %v34
    %v565 = vld [vmem:[%s4] sm:$0xff]
    %v566 = vld [vmem:[%s4 + $0x8] sm:$0xff]
    %v567 = vld [vmem:[%s4 + $0x10] sm:$0xff]
    %v568 = vld [vmem:[%s4 + $0x18] sm:$0xff]
    %v569 = vld [vmem:[%s4 + $0x20] sm:$0xff]
    %v570 = vld [vmem:[%s4 + $0x28] sm:$0xff]
    %v571 = vld [vmem:[%s4 + $0x30] sm:$0xff]
    %v572 = vld [vmem:[%s4 + $0x38] sm:$0xff]
    %v573 = vld [vmem:[%s5] sm:$0xff]
    %v574 = vld [vmem:[%s5 + $0x8] sm:$0xff]
    %v575 = vld [vmem:[%s5 + $0x10] sm:$0xff]
    %v576 = vld [vmem:[%s5 + $0x18] sm:$0xff]
    %v577 = vld [vmem:[%s5 + $0x20] sm:$0xff]
    %v578 = vld [vmem:[%s5 + $0x28] sm:$0xff]
    %v579 = vld [vmem:[%s5 + $0x30] sm:$0xff]
    %v580 = vld [vmem:[%s5 + $0x38] sm:$0xff]
    %582 = vset.pattern.permute.xlu0 0
    %583 = vperm.xlu0 %582, %v573
    %v584 = vpop.permute.xlu0 %583
    %587 = vset.pattern.permute.xlu0 0
    %588 = vperm.xlu0 %587, %v574
    %v589 = vpop.permute.xlu0 %588
    %592 = vset.pattern.permute.xlu0 0
    %593 = vperm.xlu0 %592, %v575
    %v594 = vpop.permute.xlu0 %593
    %597 = vset.pattern.permute.xlu0 0
    %598 = vperm.xlu0 %597, %v576
    %v599 = vpop.permute.xlu0 %598
    %602 = vset.pattern.permute.xlu0 0
    %603 = vperm.xlu0 %602, %v577
    %v604 = vpop.permute.xlu0 %603
    %607 = vset.pattern.permute.xlu0 0
    %608 = vperm.xlu0 %607, %v578
    %v609 = vpop.permute.xlu0 %608
    %612 = vset.pattern.permute.xlu0 0
    %613 = vperm.xlu0 %612, %v579
    %v614 = vpop.permute.xlu0 %613
    %617 = vset.pattern.permute.xlu0 0
    %618 = vperm.xlu0 %617, %v580
    %v619 = vpop.permute.xlu0 %618
    %vm621 = vcmask 97280
    %v623 = vsel %vm621, %v565, 0
    %v626 = vsel %vm621, %v566, 0
    %v629 = vsel %vm621, %v567, 0
    %v632 = vsel %vm621, %v568, 0
    %v635 = vsel %vm621, %v569, 0
    %v638 = vsel %vm621, %v570, 0
    %v641 = vsel %vm621, %v571, 0
    %v644 = vsel %vm621, %v572, 0
    %vm646 = vcmask 1043456
    %v647 = vsel %vm646, %v31, 0
    %v649 = vsel %vm646, %v561, 0
    %v651 = vsel %vm646, %v32, 0
    %v653 = vsel %vm646, %v562, 0
    %v655 = vsel %vm646, %v33, 0
    %v657 = vsel %vm646, %v563, 0
    %v659 = vsel %vm646, %v34, 0
    %v661 = vsel %vm646, %v564, 0
    %663 = vmatprep.subr.mxu0 0.0
    %664 = vmatpush1.msra.mxu0 0.0
    %665 = vmatprep.subr.mxu0 0.0
    %666 = vmatpush1.msra.mxu0 0.0
    %667 = vmatprep.subr.mxu0 0.0
    %668 = vmatpush1.msra.mxu0 0.0
    %669 = vmatprep.subr.mxu0 0.0
    %670 = vmatpush1.msra.mxu0 0.0
    %671 = vmatprep.subr.mxu0 0.0
    %672 = vmatpush1.msra.mxu0 0.0
    %673 = vmatprep.subr.mxu0 0.0
    %674 = vmatpush1.msra.mxu0 0.0
    %675 = vmatprep.subr.mxu0 0.0
    %676 = vmatpush1.msra.mxu0 0.0
    %677 = vmatprep.subr.mxu0 0.0
    %678 = vmatpush1.msra.mxu0 0.0
    %679 = vmatprep.subr.mxu0 0.0
    %680 = vmatpush1.msra.mxu0 0.0
    %681 = vmatprep.subr.mxu0 0.0
    %682 = vmatpush1.msra.mxu0 0.0
    %683 = vmatprep.subr.mxu0 0.0
    %684 = vmatpush1.msra.mxu0 0.0
    %685 = vmatprep.subr.mxu0 0.0
    %686 = vmatpush1.msra.mxu0 0.0
    %687 = vmatprep.subr.mxu0 0.0
    %688 = vmatpush1.msra.mxu0 0.0
    %689 = vmatprep.subr.mxu0 0.0
    %690 = vmatpush1.msra.mxu0 0.0
    %691 = vmatprep.subr.mxu0 %v649
    %692 = vmatpush1.msra.mxu0 %v647
    %693 = vmatprep.subr.mxu0 %v550
    %694 = vmatpush1.msra.mxu0 %v549
    %695 = vmatprep.subr.mxu0 0.0
    %696 = vmatpush2.msra.mxu0 0.0
    %697 = vmatprep.subr.mxu0 0.0
    %698 = vmatpush2.msra.mxu0 0.0
    %699 = vmatprep.subr.mxu0 0.0
    %700 = vmatpush2.msra.mxu0 0.0
    %701 = vmatprep.subr.mxu0 0.0
    %702 = vmatpush2.msra.mxu0 0.0
    %703 = vmatprep.subr.mxu0 0.0
    %704 = vmatpush2.msra.mxu0 0.0
    %705 = vmatprep.subr.mxu0 0.0
    %706 = vmatpush2.msra.mxu0 0.0
    %707 = vmatprep.subr.mxu0 0.0
    %708 = vmatpush2.msra.mxu0 0.0
    %709 = vmatprep.subr.mxu0 0.0
    %710 = vmatpush2.msra.mxu0 0.0
    %711 = vmatprep.subr.mxu0 0.0
    %712 = vmatpush2.msra.mxu0 0.0
    %713 = vmatprep.subr.mxu0 0.0
    %714 = vmatpush2.msra.mxu0 0.0
    %715 = vmatprep.subr.mxu0 0.0
    %716 = vmatpush2.msra.mxu0 0.0
    %717 = vmatprep.subr.mxu0 0.0
    %718 = vmatpush2.msra.mxu0 0.0
    %719 = vmatprep.subr.mxu0 0.0
    %720 = vmatpush2.msra.mxu0 0.0
    %721 = vmatprep.subr.mxu0 0.0
    %722 = vmatpush2.msra.mxu0 0.0
    %723 = vmatprep.subr.mxu0 0.0
    %724 = vmatpush2.msra.mxu0 0.0
    %725 = vmatprep.subr.mxu0 0.0
    %726 = vmatpush2.msra.mxu0 0.0
    %727 = vmatprep.mubr.f32.mxu0 0.0
    %728 = vmatmul.mubr.f32.gmra.mxu0 %v623
    %v729 = vpop.f32.mrf.mxu0
    %v730 = vadd.f32 %v584, %v729
    %v731 = vpop.f32.mrf.mxu0
    %v732 = vadd.f32 %v584, %v731
    %733 = vmatprep.mubr.f32.mxu0 0.0
    %734 = vmatmul.mubr.f32.gmra.mxu0 %v626
    %v735 = vpop.f32.mrf.mxu0
    %v736 = vadd.f32 %v589, %v735
    %v737 = vpop.f32.mrf.mxu0
    %v738 = vadd.f32 %v589, %v737
    %739 = vmatprep.mubr.f32.mxu0 0.0
    %740 = vmatmul.mubr.f32.gmra.mxu0 %v629
    %v741 = vpop.f32.mrf.mxu0
    %v742 = vadd.f32 %v594, %v741
    %v743 = vpop.f32.mrf.mxu0
    %v744 = vadd.f32 %v594, %v743
    %745 = vmatprep.mubr.f32.mxu0 0.0
    %746 = vmatmul.mubr.f32.gmra.mxu0 %v632
    %v747 = vpop.f32.mrf.mxu0
    %v748 = vadd.f32 %v599, %v747
    %v749 = vpop.f32.mrf.mxu0
    %v750 = vadd.f32 %v599, %v749
    %751 = vmatprep.mubr.f32.mxu0 0.0
    %752 = vmatmul.mubr.f32.gmra.mxu0 %v635
    %v753 = vpop.f32.mrf.mxu0
    %v754 = vadd.f32 %v604, %v753
    %v755 = vpop.f32.mrf.mxu0
    %v756 = vadd.f32 %v604, %v755
    %757 = vmatprep.mubr.f32.mxu0 0.0
    %758 = vmatmul.mubr.f32.gmra.mxu0 %v638
    %v759 = vpop.f32.mrf.mxu0
    %v760 = vadd.f32 %v609, %v759
    %v761 = vpop.f32.mrf.mxu0
    %v762 = vadd.f32 %v609, %v761
    %763 = vmatprep.mubr.f32.mxu0 0.0
    %764 = vmatmul.mubr.f32.gmra.mxu0 %v641
    %v765 = vpop.f32.mrf.mxu0
    %v766 = vadd.f32 %v614, %v765
    %v767 = vpop.f32.mrf.mxu0
    %v768 = vadd.f32 %v614, %v767
    %769 = vmatprep.mubr.f32.mxu0 0.0
    %770 = vmatmul.mubr.f32.gmra.mxu0 %v644
    %v771 = vpop.f32.mrf.mxu0
    %v772 = vadd.f32 %v619, %v771
    %v773 = vpop.f32.mrf.mxu0
    %v774 = vadd.f32 %v619, %v773
    %775 = vdwg.mxu0
    %776 = vmatprep.subr.mxu0 0.0
    %777 = vmatpush1.msra.mxu0 0.0
    %778 = vmatprep.subr.mxu0 0.0
    %779 = vmatpush1.msra.mxu0 0.0
    %780 = vmatprep.subr.mxu0 0.0
    %781 = vmatpush1.msra.mxu0 0.0
    %782 = vmatprep.subr.mxu0 0.0
    %783 = vmatpush1.msra.mxu0 0.0
    %784 = vmatprep.subr.mxu0 0.0
    %785 = vmatpush1.msra.mxu0 0.0
    %786 = vmatprep.subr.mxu0 0.0
    %787 = vmatpush1.msra.mxu0 0.0
    %788 = vmatprep.subr.mxu0 0.0
    %789 = vmatpush1.msra.mxu0 0.0
    %790 = vmatprep.subr.mxu0 0.0
    %791 = vmatpush1.msra.mxu0 0.0
    %792 = vmatprep.subr.mxu0 0.0
    %793 = vmatpush1.msra.mxu0 0.0
    %794 = vmatprep.subr.mxu0 0.0
    %795 = vmatpush1.msra.mxu0 0.0
    %796 = vmatprep.subr.mxu0 0.0
    %797 = vmatpush1.msra.mxu0 0.0
    %798 = vmatprep.subr.mxu0 0.0
    %799 = vmatpush1.msra.mxu0 0.0
    %800 = vmatprep.subr.mxu0 0.0
    %801 = vmatpush1.msra.mxu0 0.0
    %802 = vmatprep.subr.mxu0 0.0
    %803 = vmatpush1.msra.mxu0 0.0
    %804 = vmatprep.subr.mxu0 %v653
    %805 = vmatpush1.msra.mxu0 %v651
    %806 = vmatprep.subr.mxu0 %v552
    %807 = vmatpush1.msra.mxu0 %v551
    %808 = vmatprep.subr.mxu0 0.0
    %809 = vmatpush2.msra.mxu0 0.0
    %810 = vmatprep.subr.mxu0 0.0
    %811 = vmatpush2.msra.mxu0 0.0
    %812 = vmatprep.subr.mxu0 0.0
    %813 = vmatpush2.msra.mxu0 0.0
    %814 = vmatprep.subr.mxu0 0.0
    %815 = vmatpush2.msra.mxu0 0.0
    %816 = vmatprep.subr.mxu0 0.0
    %817 = vmatpush2.msra.mxu0 0.0
    %818 = vmatprep.subr.mxu0 0.0
    %819 = vmatpush2.msra.mxu0 0.0
    %820 = vmatprep.subr.mxu0 0.0
    %821 = vmatpush2.msra.mxu0 0.0
    %822 = vmatprep.subr.mxu0 0.0
    %823 = vmatpush2.msra.mxu0 0.0
    %824 = vmatprep.subr.mxu0 0.0
    %825 = vmatpush2.msra.mxu0 0.0
    %826 = vmatprep.subr.mxu0 0.0
    %827 = vmatpush2.msra.mxu0 0.0
    %828 = vmatprep.subr.mxu0 0.0
    %829 = vmatpush2.msra.mxu0 0.0
    %830 = vmatprep.subr.mxu0 0.0
    %831 = vmatpush2.msra.mxu0 0.0
    %832 = vmatprep.subr.mxu0 0.0
    %833 = vmatpush2.msra.mxu0 0.0
    %834 = vmatprep.subr.mxu0 0.0
    %835 = vmatpush2.msra.mxu0 0.0
    %836 = vmatprep.subr.mxu0 0.0
    %837 = vmatpush2.msra.mxu0 0.0
    %838 = vmatprep.subr.mxu0 0.0
    %839 = vmatpush2.msra.mxu0 0.0
    %840 = vmatprep.mubr.f32.mxu0 0.0
    %841 = vmatmul.mubr.f32.gmra.mxu0 %v623
    %v842 = vpop.f32.mrf.mxu0
    %v843 = vadd.f32 %v584, %v842
    %v844 = vpop.f32.mrf.mxu0
    %v845 = vadd.f32 %v584, %v844
    %846 = vmatprep.mubr.f32.mxu0 0.0
    %847 = vmatmul.mubr.f32.gmra.mxu0 %v626
    %v848 = vpop.f32.mrf.mxu0
    %v849 = vadd.f32 %v589, %v848
    %v850 = vpop.f32.mrf.mxu0
    %v851 = vadd.f32 %v589, %v850
    %852 = vmatprep.mubr.f32.mxu0 0.0
    %853 = vmatmul.mubr.f32.gmra.mxu0 %v629
    %v854 = vpop.f32.mrf.mxu0
    %v855 = vadd.f32 %v594, %v854
    %v856 = vpop.f32.mrf.mxu0
    %v857 = vadd.f32 %v594, %v856
    %858 = vmatprep.mubr.f32.mxu0 0.0
    %859 = vmatmul.mubr.f32.gmra.mxu0 %v632
    %v860 = vpop.f32.mrf.mxu0
    %v861 = vadd.f32 %v599, %v860
    %v862 = vpop.f32.mrf.mxu0
    %v863 = vadd.f32 %v599, %v862
    %864 = vmatprep.mubr.f32.mxu0 0.0
    %865 = vmatmul.mubr.f32.gmra.mxu0 %v635
    %v866 = vpop.f32.mrf.mxu0
    %v867 = vadd.f32 %v604, %v866
    %v868 = vpop.f32.mrf.mxu0
    %v869 = vadd.f32 %v604, %v868
    %870 = vmatprep.mubr.f32.mxu0 0.0
    %871 = vmatmul.mubr.f32.gmra.mxu0 %v638
    %v872 = vpop.f32.mrf.mxu0
    %v873 = vadd.f32 %v609, %v872
    %v874 = vpop.f32.mrf.mxu0
    %v875 = vadd.f32 %v609, %v874
    %876 = vmatprep.mubr.f32.mxu0 0.0
    %877 = vmatmul.mubr.f32.gmra.mxu0 %v641
    %v878 = vpop.f32.mrf.mxu0
    %v879 = vadd.f32 %v614, %v878
    %v880 = vpop.f32.mrf.mxu0
    %v881 = vadd.f32 %v614, %v880
    %882 = vmatprep.mubr.f32.mxu0 0.0
    %883 = vmatmul.mubr.f32.gmra.mxu0 %v644
    %v884 = vpop.f32.mrf.mxu0
    %v885 = vadd.f32 %v619, %v884
    %v886 = vpop.f32.mrf.mxu0
    %v887 = vadd.f32 %v619, %v886
    %888 = vdwg.mxu0
    %889 = vmatprep.subr.mxu0 0.0
    %890 = vmatpush1.msra.mxu0 0.0
    %891 = vmatprep.subr.mxu0 0.0
    %892 = vmatpush1.msra.mxu0 0.0
    %893 = vmatprep.subr.mxu0 0.0
    %894 = vmatpush1.msra.mxu0 0.0
    %895 = vmatprep.subr.mxu0 0.0
    %896 = vmatpush1.msra.mxu0 0.0
    %897 = vmatprep.subr.mxu0 0.0
    %898 = vmatpush1.msra.mxu0 0.0
    %899 = vmatprep.subr.mxu0 0.0
    %900 = vmatpush1.msra.mxu0 0.0
    %901 = vmatprep.subr.mxu0 0.0
    %902 = vmatpush1.msra.mxu0 0.0
    %903 = vmatprep.subr.mxu0 0.0
    %904 = vmatpush1.msra.mxu0 0.0
    %905 = vmatprep.subr.mxu0 0.0
    %906 = vmatpush1.msra.mxu0 0.0
    %907 = vmatprep.subr.mxu0 0.0
    %908 = vmatpush1.msra.mxu0 0.0
    %909 = vmatprep.subr.mxu0 0.0
    %910 = vmatpush1.msra.mxu0 0.0
    %911 = vmatprep.subr.mxu0 0.0
    %912 = vmatpush1.msra.mxu0 0.0
    %913 = vmatprep.subr.mxu0 0.0
    %914 = vmatpush1.msra.mxu0 0.0
    %915 = vmatprep.subr.mxu0 0.0
    %916 = vmatpush1.msra.mxu0 0.0
    %917 = vmatprep.subr.mxu0 %v657
    %918 = vmatpush1.msra.mxu0 %v655
    %919 = vmatprep.subr.mxu0 %v554
    %920 = vmatpush1.msra.mxu0 %v553
    %921 = vmatprep.subr.mxu0 0.0
    %922 = vmatpush2.msra.mxu0 0.0
    %923 = vmatprep.subr.mxu0 0.0
    %924 = vmatpush2.msra.mxu0 0.0
    %925 = vmatprep.subr.mxu0 0.0
    %926 = vmatpush2.msra.mxu0 0.0
    %927 = vmatprep.subr.mxu0 0.0
    %928 = vmatpush2.msra.mxu0 0.0
    %929 = vmatprep.subr.mxu0 0.0
    %930 = vmatpush2.msra.mxu0 0.0
    %931 = vmatprep.subr.mxu0 0.0
    %932 = vmatpush2.msra.mxu0 0.0
    %933 = vmatprep.subr.mxu0 0.0
    %934 = vmatpush2.msra.mxu0 0.0
    %935 = vmatprep.subr.mxu0 0.0
    %936 = vmatpush2.msra.mxu0 0.0
    %937 = vmatprep.subr.mxu0 0.0
    %938 = vmatpush2.msra.mxu0 0.0
    %939 = vmatprep.subr.mxu0 0.0
    %940 = vmatpush2.msra.mxu0 0.0
    %941 = vmatprep.subr.mxu0 0.0
    %942 = vmatpush2.msra.mxu0 0.0
    %943 = vmatprep.subr.mxu0 0.0
    %944 = vmatpush2.msra.mxu0 0.0
    %945 = vmatprep.subr.mxu0 0.0
    %946 = vmatpush2.msra.mxu0 0.0
    %947 = vmatprep.subr.mxu0 0.0
    %948 = vmatpush2.msra.mxu0 0.0
    %949 = vmatprep.subr.mxu0 0.0
    %950 = vmatpush2.msra.mxu0 0.0
    %951 = vmatprep.subr.mxu0 0.0
    %952 = vmatpush2.msra.mxu0 0.0
    %953 = vmatprep.mubr.f32.mxu0 0.0
    %954 = vmatmul.mubr.f32.gmra.mxu0 %v623
    %v955 = vpop.f32.mrf.mxu0
    %v956 = vadd.f32 %v584, %v955
    %v957 = vpop.f32.mrf.mxu0
    %v958 = vadd.f32 %v584, %v957
    %959 = vmatprep.mubr.f32.mxu0 0.0
    %960 = vmatmul.mubr.f32.gmra.mxu0 %v626
    %v961 = vpop.f32.mrf.mxu0
    %v962 = vadd.f32 %v589, %v961
    %v963 = vpop.f32.mrf.mxu0
    %v964 = vadd.f32 %v589, %v963
    %965 = vmatprep.mubr.f32.mxu0 0.0
    %966 = vmatmul.mubr.f32.gmra.mxu0 %v629
    %v967 = vpop.f32.mrf.mxu0
    %v968 = vadd.f32 %v594, %v967
    %v969 = vpop.f32.mrf.mxu0
    %v970 = vadd.f32 %v594, %v969
    %971 = vmatprep.mubr.f32.mxu0 0.0
    %972 = vmatmul.mubr.f32.gmra.mxu0 %v632
    %v973 = vpop.f32.mrf.mxu0
    %v974 = vadd.f32 %v599, %v973
    %v975 = vpop.f32.mrf.mxu0
    %v976 = vadd.f32 %v599, %v975
    %977 = vmatprep.mubr.f32.mxu0 0.0
    %978 = vmatmul.mubr.f32.gmra.mxu0 %v635
    %v979 = vpop.f32.mrf.mxu0
    %v980 = vadd.f32 %v604, %v979
    %v981 = vpop.f32.mrf.mxu0
    %v982 = vadd.f32 %v604, %v981
    %983 = vmatprep.mubr.f32.mxu0 0.0
    %984 = vmatmul.mubr.f32.gmra.mxu0 %v638
    %v985 = vpop.f32.mrf.mxu0
    %v986 = vadd.f32 %v609, %v985
    %v987 = vpop.f32.mrf.mxu0
    %v988 = vadd.f32 %v609, %v987
    %989 = vmatprep.mubr.f32.mxu0 0.0
    %990 = vmatmul.mubr.f32.gmra.mxu0 %v641
    %v991 = vpop.f32.mrf.mxu0
    %v992 = vadd.f32 %v614, %v991
    %v993 = vpop.f32.mrf.mxu0
    %v994 = vadd.f32 %v614, %v993
    %995 = vmatprep.mubr.f32.mxu0 0.0
    %996 = vmatmul.mubr.f32.gmra.mxu0 %v644
    %v997 = vpop.f32.mrf.mxu0
    %v998 = vadd.f32 %v619, %v997
    %v999 = vpop.f32.mrf.mxu0
    %v1000 = vadd.f32 %v619, %v999
    %1001 = vdwg.mxu0
    %1002 = vmatprep.subr.mxu0 0.0
    %1003 = vmatpush1.msra.mxu0 0.0
    %1004 = vmatprep.subr.mxu0 0.0
    %1005 = vmatpush1.msra.mxu0 0.0
    %1006 = vmatprep.subr.mxu0 0.0
    %1007 = vmatpush1.msra.mxu0 0.0
    %1008 = vmatprep.subr.mxu0 0.0
    %1009 = vmatpush1.msra.mxu0 0.0
    %1010 = vmatprep.subr.mxu0 0.0
    %1011 = vmatpush1.msra.mxu0 0.0
    %1012 = vmatprep.subr.mxu0 0.0
    %1013 = vmatpush1.msra.mxu0 0.0
    %1014 = vmatprep.subr.mxu0 0.0
    %1015 = vmatpush1.msra.mxu0 0.0
    %1016 = vmatprep.subr.mxu0 0.0
    %1017 = vmatpush1.msra.mxu0 0.0
    %1018 = vmatprep.subr.mxu0 0.0
    %1019 = vmatpush1.msra.mxu0 0.0
    %1020 = vmatprep.subr.mxu0 0.0
    %1021 = vmatpush1.msra.mxu0 0.0
    %1022 = vmatprep.subr.mxu0 0.0
    %1023 = vmatpush1.msra.mxu0 0.0
    %1024 = vmatprep.subr.mxu0 0.0
    %1025 = vmatpush1.msra.mxu0 0.0
    %1026 = vmatprep.subr.mxu0 0.0
    %1027 = vmatpush1.msra.mxu0 0.0
    %1028 = vmatprep.subr.mxu0 0.0
    %1029 = vmatpush1.msra.mxu0 0.0
    %1030 = vmatprep.subr.mxu0 %v661
    %1031 = vmatpush1.msra.mxu0 %v659
    %1032 = vmatprep.subr.mxu0 %v556
    %1033 = vmatpush1.msra.mxu0 %v555
    %1034 = vmatprep.subr.mxu0 0.0
    %1035 = vmatpush2.msra.mxu0 0.0
    %1036 = vmatprep.subr.mxu0 0.0
    %1037 = vmatpush2.msra.mxu0 0.0
    %1038 = vmatprep.subr.mxu0 0.0
    %1039 = vmatpush2.msra.mxu0 0.0
    %1040 = vmatprep.subr.mxu0 0.0
    %1041 = vmatpush2.msra.mxu0 0.0
    %1042 = vmatprep.subr.mxu0 0.0
    %1043 = vmatpush2.msra.mxu0 0.0
    %1044 = vmatprep.subr.mxu0 0.0
    %1045 = vmatpush2.msra.mxu0 0.0
    %1046 = vmatprep.subr.mxu0 0.0
    %1047 = vmatpush2.msra.mxu0 0.0
    %1048 = vmatprep.subr.mxu0 0.0
    %1049 = vmatpush2.msra.mxu0 0.0
    %1050 = vmatprep.subr.mxu0 0.0
    %1051 = vmatpush2.msra.mxu0 0.0
    %1052 = vmatprep.subr.mxu0 0.0
    %1053 = vmatpush2.msra.mxu0 0.0
    %1054 = vmatprep.subr.mxu0 0.0
    %1055 = vmatpush2.msra.mxu0 0.0
    %1056 = vmatprep.subr.mxu0 0.0
    %1057 = vmatpush2.msra.mxu0 0.0
    %1058 = vmatprep.subr.mxu0 0.0
    %1059 = vmatpush2.msra.mxu0 0.0
    %1060 = vmatprep.subr.mxu0 0.0
    %1061 = vmatpush2.msra.mxu0 0.0
    %1062 = vmatprep.subr.mxu0 0.0
    %1063 = vmatpush2.msra.mxu0 0.0
    %1064 = vmatprep.subr.mxu0 0.0
    %1065 = vmatpush2.msra.mxu0 0.0
    %1066 = vmatprep.mubr.f32.mxu0 0.0
    %1067 = vmatmul.mubr.f32.gmra.mxu0 %v623
    %v1068 = vpop.f32.mrf.mxu0
    %v1069 = vadd.f32 %v584, %v1068
    %v1070 = vpop.f32.mrf.mxu0
    %v1071 = vadd.f32 %v584, %v1070
    %1072 = vmatprep.mubr.f32.mxu0 0.0
    %1073 = vmatmul.mubr.f32.gmra.mxu0 %v626
    %v1074 = vpop.f32.mrf.mxu0
    %v1075 = vadd.f32 %v589, %v1074
    %v1076 = vpop.f32.mrf.mxu0
    %v1077 = vadd.f32 %v589, %v1076
    %1078 = vmatprep.mubr.f32.mxu0 0.0
    %1079 = vmatmul.mubr.f32.gmra.mxu0 %v629
    %v1080 = vpop.f32.mrf.mxu0
    %v1081 = vadd.f32 %v594, %v1080
    %v1082 = vpop.f32.mrf.mxu0
    %v1083 = vadd.f32 %v594, %v1082
    %1084 = vmatprep.mubr.f32.mxu0 0.0
    %1085 = vmatmul.mubr.f32.gmra.mxu0 %v632
    %v1086 = vpop.f32.mrf.mxu0
    %v1087 = vadd.f32 %v599, %v1086
    %v1088 = vpop.f32.mrf.mxu0
    %v1089 = vadd.f32 %v599, %v1088
    %1090 = vmatprep.mubr.f32.mxu0 0.0
    %1091 = vmatmul.mubr.f32.gmra.mxu0 %v635
    %v1092 = vpop.f32.mrf.mxu0
    %v1093 = vadd.f32 %v604, %v1092
    %v1094 = vpop.f32.mrf.mxu0
    %v1095 = vadd.f32 %v604, %v1094
    %1096 = vmatprep.mubr.f32.mxu0 0.0
    %1097 = vmatmul.mubr.f32.gmra.mxu0 %v638
    %v1098 = vpop.f32.mrf.mxu0
    %v1099 = vadd.f32 %v609, %v1098
    %v1100 = vpop.f32.mrf.mxu0
    %v1101 = vadd.f32 %v609, %v1100
    %1102 = vmatprep.mubr.f32.mxu0 0.0
    %1103 = vmatmul.mubr.f32.gmra.mxu0 %v641
    %v1104 = vpop.f32.mrf.mxu0
    %v1105 = vadd.f32 %v614, %v1104
    %v1106 = vpop.f32.mrf.mxu0
    %v1107 = vadd.f32 %v614, %v1106
    %1108 = vmatprep.mubr.f32.mxu0 0.0
    %1109 = vmatmul.mubr.f32.gmra.mxu0 %v644
    %v1110 = vpop.f32.mrf.mxu0
    %v1111 = vadd.f32 %v619, %v1110
    %v1112 = vpop.f32.mrf.mxu0
    %v1113 = vadd.f32 %v619, %v1112
    %1114 = vdwg.mxu0
    %v1115 = vtanh.pop %v730
    %v1116 = vtanh.pop %v732
    %v1117 = vtanh.pop %v843
    %v1118 = vtanh.pop %v845
    %v1119 = vtanh.pop %v956
    %v1120 = vtanh.pop %v958
    %v1121 = vtanh.pop %v1069
    %v1122 = vtanh.pop %v1071
    %v1123 = vtanh.pop %v736
    %v1124 = vtanh.pop %v738
    %v1125 = vtanh.pop %v849
    %v1126 = vtanh.pop %v851
    %v1127 = vtanh.pop %v962
    %v1128 = vtanh.pop %v964
    %v1129 = vtanh.pop %v1075
    %v1130 = vtanh.pop %v1077
    %v1131 = vtanh.pop %v742
    %v1132 = vtanh.pop %v744
    %v1133 = vtanh.pop %v855
    %v1134 = vtanh.pop %v857
    %v1135 = vtanh.pop %v968
    %v1136 = vtanh.pop %v970
    %v1137 = vtanh.pop %v1081
    %v1138 = vtanh.pop %v1083
    %v1139 = vtanh.pop %v748
    %v1140 = vtanh.pop %v750
    %v1141 = vtanh.pop %v861
    %v1142 = vtanh.pop %v863
    %v1143 = vtanh.pop %v974
    %v1144 = vtanh.pop %v976
    %v1145 = vtanh.pop %v1087
    %v1146 = vtanh.pop %v1089
    %v1147 = vtanh.pop %v754
    %v1148 = vtanh.pop %v756
    %v1149 = vtanh.pop %v867
    %v1150 = vtanh.pop %v869
    %v1151 = vtanh.pop %v980
    %v1152 = vtanh.pop %v982
    %v1153 = vtanh.pop %v1093
    %v1154 = vtanh.pop %v1095
    %v1155 = vtanh.pop %v760
    %v1156 = vtanh.pop %v762
    %v1157 = vtanh.pop %v873
    %v1158 = vtanh.pop %v875
    %v1159 = vtanh.pop %v986
    %v1160 = vtanh.pop %v988
    %v1161 = vtanh.pop %v1099
    %v1162 = vtanh.pop %v1101
    %v1163 = vtanh.pop %v766
    %v1164 = vtanh.pop %v768
    %v1165 = vtanh.pop %v879
    %v1166 = vtanh.pop %v881
    %v1167 = vtanh.pop %v992
    %v1168 = vtanh.pop %v994
    %v1169 = vtanh.pop %v1105
    %v1170 = vtanh.pop %v1107
    %v1171 = vtanh.pop %v772
    %v1172 = vtanh.pop %v774
    %v1173 = vtanh.pop %v885
    %v1174 = vtanh.pop %v887
    %v1175 = vtanh.pop %v998
    %v1176 = vtanh.pop %v1000
    %v1177 = vtanh.pop %v1111
    %v1178 = vtanh.pop %v1113
    %v1179 = vld [vmem:[%s6] sm:$0xff]
    %v1180 = vld [vmem:[%s6 + $0x8] sm:$0xff]
    %v1181 = vld [vmem:[%s7] sm:$0xff]
    %v1182 = vld [vmem:[%s7 + $0x8] sm:$0xff]
    %1184 = vset.pattern.permute.xlu0 0
    %1185 = vperm.xlu0 %1184, %v1181
    %v1186 = vpop.permute.xlu0 %1185
    %1189 = vset.pattern.permute.xlu0 0
    %1190 = vperm.xlu0 %1189, %v1182
    %v1191 = vpop.permute.xlu0 %1190
    %vm1193 = vcmask 523264
    %v1195 = vsel %vm1193, %v1179, 0
    %v1198 = vsel %vm1193, %v1180, 0
    %1200 = vmatprep.subr.mxu0 0.0
    %1201 = vmatpush1.msra.mxu0 0.0
    %1202 = vmatprep.subr.mxu0 0.0
    %1203 = vmatpush1.msra.mxu0 0.0
    %1204 = vmatprep.subr.mxu0 0.0
    %1205 = vmatpush1.msra.mxu0 0.0
    %1206 = vmatprep.subr.mxu0 0.0
    %1207 = vmatpush1.msra.mxu0 0.0
    %1208 = vmatprep.subr.mxu0 0.0
    %1209 = vmatpush1.msra.mxu0 0.0
    %1210 = vmatprep.subr.mxu0 0.0
    %1211 = vmatpush1.msra.mxu0 0.0
    %1212 = vmatprep.subr.mxu0 0.0
    %1213 = vmatpush1.msra.mxu0 0.0
    %1214 = vmatprep.subr.mxu0 0.0
    %1215 = vmatpush1.msra.mxu0 0.0
    %1216 = vmatprep.subr.mxu0 %v1172
    %1217 = vmatpush1.msra.mxu0 %v1171
    %1218 = vmatprep.subr.mxu0 %v1164
    %1219 = vmatpush1.msra.mxu0 %v1163
    %1220 = vmatprep.subr.mxu0 %v1156
    %1221 = vmatpush1.msra.mxu0 %v1155
    %1222 = vmatprep.subr.mxu0 %v1148
    %1223 = vmatpush1.msra.mxu0 %v1147
    %1224 = vmatprep.subr.mxu0 %v1140
    %1225 = vmatpush1.msra.mxu0 %v1139
    %1226 = vmatprep.subr.mxu0 %v1132
    %1227 = vmatpush1.msra.mxu0 %v1131
    %1228 = vmatprep.subr.mxu0 %v1124
    %1229 = vmatpush1.msra.mxu0 %v1123
    %1230 = vmatprep.subr.mxu0 %v1116
    %1231 = vmatpush1.msra.mxu0 %v1115
    %1232 = vmatprep.subr.mxu0 0.0
    %1233 = vmatpush2.msra.mxu0 0.0
    %1234 = vmatprep.subr.mxu0 0.0
    %1235 = vmatpush2.msra.mxu0 0.0
    %1236 = vmatprep.subr.mxu0 0.0
    %1237 = vmatpush2.msra.mxu0 0.0
    %1238 = vmatprep.subr.mxu0 0.0
    %1239 = vmatpush2.msra.mxu0 0.0
    %1240 = vmatprep.subr.mxu0 0.0
    %1241 = vmatpush2.msra.mxu0 0.0
    %1242 = vmatprep.subr.mxu0 0.0
    %1243 = vmatpush2.msra.mxu0 0.0
    %1244 = vmatprep.subr.mxu0 0.0
    %1245 = vmatpush2.msra.mxu0 0.0
    %1246 = vmatprep.subr.mxu0 0.0
    %1247 = vmatpush2.msra.mxu0 0.0
    %1248 = vmatprep.subr.mxu0 0.0
    %1249 = vmatpush2.msra.mxu0 0.0
    %1250 = vmatprep.subr.mxu0 0.0
    %1251 = vmatpush2.msra.mxu0 0.0
    %1252 = vmatprep.subr.mxu0 0.0
    %1253 = vmatpush2.msra.mxu0 0.0
    %1254 = vmatprep.subr.mxu0 0.0
    %1255 = vmatpush2.msra.mxu0 0.0
    %1256 = vmatprep.subr.mxu0 0.0
    %1257 = vmatpush2.msra.mxu0 0.0
    %1258 = vmatprep.subr.mxu0 0.0
    %1259 = vmatpush2.msra.mxu0 0.0
    %1260 = vmatprep.subr.mxu0 0.0
    %1261 = vmatpush2.msra.mxu0 0.0
    %1262 = vmatprep.subr.mxu0 0.0
    %1263 = vmatpush2.msra.mxu0 0.0
    %1264 = vmatprep.mubr.f32.mxu0 0.0
    %1265 = vmatmul.mubr.f32.gmra.mxu0 %v1195
    %v1266 = vpop.f32.mrf.mxu0
    %v1267 = vadd.f32 %v1186, %v1266
    %v1268 = vpop.f32.mrf.mxu0
    %v1269 = vadd.f32 %v1186, %v1268
    %1270 = vmatprep.mubr.f32.mxu0 0.0
    %1271 = vmatmul.mubr.f32.gmra.mxu0 %v1198
    %v1272 = vpop.f32.mrf.mxu0
    %v1273 = vadd.f32 %v1191, %v1272
    %v1274 = vpop.f32.mrf.mxu0
    %v1275 = vadd.f32 %v1191, %v1274
    %1276 = vdwg.mxu0
    %1277 = vmatprep.subr.mxu0 0.0
    %1278 = vmatpush1.msra.mxu0 0.0
    %1279 = vmatprep.subr.mxu0 0.0
    %1280 = vmatpush1.msra.mxu0 0.0
    %1281 = vmatprep.subr.mxu0 0.0
    %1282 = vmatpush1.msra.mxu0 0.0
    %1283 = vmatprep.subr.mxu0 0.0
    %1284 = vmatpush1.msra.mxu0 0.0
    %1285 = vmatprep.subr.mxu0 0.0
    %1286 = vmatpush1.msra.mxu0 0.0
    %1287 = vmatprep.subr.mxu0 0.0
    %1288 = vmatpush1.msra.mxu0 0.0
    %1289 = vmatprep.subr.mxu0 0.0
    %1290 = vmatpush1.msra.mxu0 0.0
    %1291 = vmatprep.subr.mxu0 0.0
    %1292 = vmatpush1.msra.mxu0 0.0
    %1293 = vmatprep.subr.mxu0 %v1174
    %1294 = vmatpush1.msra.mxu0 %v1173
    %1295 = vmatprep.subr.mxu0 %v1166
    %1296 = vmatpush1.msra.mxu0 %v1165
    %1297 = vmatprep.subr.mxu0 %v1158
    %1298 = vmatpush1.msra.mxu0 %v1157
    %1299 = vmatprep.subr.mxu0 %v1150
    %1300 = vmatpush1.msra.mxu0 %v1149
    %1301 = vmatprep.subr.mxu0 %v1142
    %1302 = vmatpush1.msra.mxu0 %v1141
    %1303 = vmatprep.subr.mxu0 %v1134
    %1304 = vmatpush1.msra.mxu0 %v1133
    %1305 = vmatprep.subr.mxu0 %v1126
    %1306 = vmatpush1.msra.mxu0 %v1125
    %1307 = vmatprep.subr.mxu0 %v1118
    %1308 = vmatpush1.msra.mxu0 %v1117
    %1309 = vmatprep.subr.mxu0 0.0
    %1310 = vmatpush2.msra.mxu0 0.0
    %1311 = vmatprep.subr.mxu0 0.0
    %1312 = vmatpush2.msra.mxu0 0.0
    %1313 = vmatprep.subr.mxu0 0.0
    %1314 = vmatpush2.msra.mxu0 0.0
    %1315 = vmatprep.subr.mxu0 0.0
    %1316 = vmatpush2.msra.mxu0 0.0
    %1317 = vmatprep.subr.mxu0 0.0
    %1318 = vmatpush2.msra.mxu0 0.0
    %1319 = vmatprep.subr.mxu0 0.0
    %1320 = vmatpush2.msra.mxu0 0.0
    %1321 = vmatprep.subr.mxu0 0.0
    %1322 = vmatpush2.msra.mxu0 0.0
    %1323 = vmatprep.subr.mxu0 0.0
    %1324 = vmatpush2.msra.mxu0 0.0
    %1325 = vmatprep.subr.mxu0 0.0
    %1326 = vmatpush2.msra.mxu0 0.0
    %1327 = vmatprep.subr.mxu0 0.0
    %1328 = vmatpush2.msra.mxu0 0.0
    %1329 = vmatprep.subr.mxu0 0.0
    %1330 = vmatpush2.msra.mxu0 0.0
    %1331 = vmatprep.subr.mxu0 0.0
    %1332 = vmatpush2.msra.mxu0 0.0
    %1333 = vmatprep.subr.mxu0 0.0
    %1334 = vmatpush2.msra.mxu0 0.0
    %1335 = vmatprep.subr.mxu0 0.0
    %1336 = vmatpush2.msra.mxu0 0.0
    %1337 = vmatprep.subr.mxu0 0.0
    %1338 = vmatpush2.msra.mxu0 0.0
    %1339 = vmatprep.subr.mxu0 0.0
    %1340 = vmatpush2.msra.mxu0 0.0
    %1341 = vmatprep.mubr.f32.mxu0 0.0
    %1342 = vmatmul.mubr.f32.gmra.mxu0 %v1195
    %v1343 = vpop.f32.mrf.mxu0
    %v1344 = vadd.f32 %v1186, %v1343
    %v1345 = vpop.f32.mrf.mxu0
    %v1346 = vadd.f32 %v1186, %v1345
    %1347 = vmatprep.mubr.f32.mxu0 0.0
    %1348 = vmatmul.mubr.f32.gmra.mxu0 %v1198
    %v1349 = vpop.f32.mrf.mxu0
    %v1350 = vadd.f32 %v1191, %v1349
    %v1351 = vpop.f32.mrf.mxu0
    %v1352 = vadd.f32 %v1191, %v1351
    %1353 = vdwg.mxu0
    %1354 = vmatprep.subr.mxu0 0.0
    %1355 = vmatpush1.msra.mxu0 0.0
    %1356 = vmatprep.subr.mxu0 0.0
    %1357 = vmatpush1.msra.mxu0 0.0
    %1358 = vmatprep.subr.mxu0 0.0
    %1359 = vmatpush1.msra.mxu0 0.0
    %1360 = vmatprep.subr.mxu0 0.0
    %1361 = vmatpush1.msra.mxu0 0.0
    %1362 = vmatprep.subr.mxu0 0.0
    %1363 = vmatpush1.msra.mxu0 0.0
    %1364 = vmatprep.subr.mxu0 0.0
    %1365 = vmatpush1.msra.mxu0 0.0
    %1366 = vmatprep.subr.mxu0 0.0
    %1367 = vmatpush1.msra.mxu0 0.0
    %1368 = vmatprep.subr.mxu0 0.0
    %1369 = vmatpush1.msra.mxu0 0.0
    %1370 = vmatprep.subr.mxu0 %v1176
    %1371 = vmatpush1.msra.mxu0 %v1175
    %1372 = vmatprep.subr.mxu0 %v1168
    %1373 = vmatpush1.msra.mxu0 %v1167
    %1374 = vmatprep.subr.mxu0 %v1160
    %1375 = vmatpush1.msra.mxu0 %v1159
    %1376 = vmatprep.subr.mxu0 %v1152
    %1377 = vmatpush1.msra.mxu0 %v1151
    %1378 = vmatprep.subr.mxu0 %v1144
    %1379 = vmatpush1.msra.mxu0 %v1143
    %1380 = vmatprep.subr.mxu0 %v1136
    %1381 = vmatpush1.msra.mxu0 %v1135
    %1382 = vmatprep.subr.mxu0 %v1128
    %1383 = vmatpush1.msra.mxu0 %v1127
    %1384 = vmatprep.subr.mxu0 %v1120
    %1385 = vmatpush1.msra.mxu0 %v1119
    %1386 = vmatprep.subr.mxu0 0.0
    %1387 = vmatpush2.msra.mxu0 0.0
    %1388 = vmatprep.subr.mxu0 0.0
    %1389 = vmatpush2.msra.mxu0 0.0
    %1390 = vmatprep.subr.mxu0 0.0
    %1391 = vmatpush2.msra.mxu0 0.0
    %1392 = vmatprep.subr.mxu0 0.0
    %1393 = vmatpush2.msra.mxu0 0.0
    %1394 = vmatprep.subr.mxu0 0.0
    %1395 = vmatpush2.msra.mxu0 0.0
    %1396 = vmatprep.subr.mxu0 0.0
    %1397 = vmatpush2.msra.mxu0 0.0
    %1398 = vmatprep.subr.mxu0 0.0
    %1399 = vmatpush2.msra.mxu0 0.0
    %1400 = vmatprep.subr.mxu0 0.0
    %1401 = vmatpush2.msra.mxu0 0.0
    %1402 = vmatprep.subr.mxu0 0.0
    %1403 = vmatpush2.msra.mxu0 0.0
    %1404 = vmatprep.subr.mxu0 0.0
    %1405 = vmatpush2.msra.mxu0 0.0
    %1406 = vmatprep.subr.mxu0 0.0
    %1407 = vmatpush2.msra.mxu0 0.0
    %1408 = vmatprep.subr.mxu0 0.0
    %1409 = vmatpush2.msra.mxu0 0.0
    %1410 = vmatprep.subr.mxu0 0.0
    %1411 = vmatpush2.msra.mxu0 0.0
    %1412 = vmatprep.subr.mxu0 0.0
    %1413 = vmatpush2.msra.mxu0 0.0
    %1414 = vmatprep.subr.mxu0 0.0
    %1415 = vmatpush2.msra.mxu0 0.0
    %1416 = vmatprep.subr.mxu0 0.0
    %1417 = vmatpush2.msra.mxu0 0.0
    %1418 = vmatprep.mubr.f32.mxu0 0.0
    %1419 = vmatmul.mubr.f32.gmra.mxu0 %v1195
    %v1420 = vpop.f32.mrf.mxu0
    %v1421 = vadd.f32 %v1186, %v1420
    %v1422 = vpop.f32.mrf.mxu0
    %v1423 = vadd.f32 %v1186, %v1422
    %1424 = vmatprep.mubr.f32.mxu0 0.0
    %1425 = vmatmul.mubr.f32.gmra.mxu0 %v1198
    %v1426 = vpop.f32.mrf.mxu0
    %v1427 = vadd.f32 %v1191, %v1426
    %v1428 = vpop.f32.mrf.mxu0
    %v1429 = vadd.f32 %v1191, %v1428
    %1430 = vdwg.mxu0
    %1431 = vmatprep.subr.mxu0 0.0
    %1432 = vmatpush1.msra.mxu0 0.0
    %1433 = vmatprep.subr.mxu0 0.0
    %1434 = vmatpush1.msra.mxu0 0.0
    %1435 = vmatprep.subr.mxu0 0.0
    %1436 = vmatpush1.msra.mxu0 0.0
    %1437 = vmatprep.subr.mxu0 0.0
    %1438 = vmatpush1.msra.mxu0 0.0
    %1439 = vmatprep.subr.mxu0 0.0
    %1440 = vmatpush1.msra.mxu0 0.0
    %1441 = vmatprep.subr.mxu0 0.0
    %1442 = vmatpush1.msra.mxu0 0.0
    %1443 = vmatprep.subr.mxu0 0.0
    %1444 = vmatpush1.msra.mxu0 0.0
    %1445 = vmatprep.subr.mxu0 0.0
    %1446 = vmatpush1.msra.mxu0 0.0
    %1447 = vmatprep.subr.mxu0 %v1178
    %1448 = vmatpush1.msra.mxu0 %v1177
    %1449 = vmatprep.subr.mxu0 %v1170
    %1450 = vmatpush1.msra.mxu0 %v1169
    %1451 = vmatprep.subr.mxu0 %v1162
    %1452 = vmatpush1.msra.mxu0 %v1161
    %1453 = vmatprep.subr.mxu0 %v1154
    %1454 = vmatpush1.msra.mxu0 %v1153
    %1455 = vmatprep.subr.mxu0 %v1146
    %1456 = vmatpush1.msra.mxu0 %v1145
    %1457 = vmatprep.subr.mxu0 %v1138
    %1458 = vmatpush1.msra.mxu0 %v1137
    %1459 = vmatprep.subr.mxu0 %v1130
    %1460 = vmatpush1.msra.mxu0 %v1129
    %1461 = vmatprep.subr.mxu0 %v1122
    %1462 = vmatpush1.msra.mxu0 %v1121
    %1463 = vmatprep.subr.mxu0 0.0
    %1464 = vmatpush2.msra.mxu0 0.0
    %1465 = vmatprep.subr.mxu0 0.0
    %1466 = vmatpush2.msra.mxu0 0.0
    %1467 = vmatprep.subr.mxu0 0.0
    %1468 = vmatpush2.msra.mxu0 0.0
    %1469 = vmatprep.subr.mxu0 0.0
    %1470 = vmatpush2.msra.mxu0 0.0
    %1471 = vmatprep.subr.mxu0 0.0
    %1472 = vmatpush2.msra.mxu0 0.0
    %1473 = vmatprep.subr.mxu0 0.0
    %1474 = vmatpush2.msra.mxu0 0.0
    %1475 = vmatprep.subr.mxu0 0.0
    %1476 = vmatpush2.msra.mxu0 0.0
    %1477 = vmatprep.subr.mxu0 0.0
    %1478 = vmatpush2.msra.mxu0 0.0
    %1479 = vmatprep.subr.mxu0 0.0
    %1480 = vmatpush2.msra.mxu0 0.0
    %1481 = vmatprep.subr.mxu0 0.0
    %1482 = vmatpush2.msra.mxu0 0.0
    %1483 = vmatprep.subr.mxu0 0.0
    %1484 = vmatpush2.msra.mxu0 0.0
    %1485 = vmatprep.subr.mxu0 0.0
    %1486 = vmatpush2.msra.mxu0 0.0
    %1487 = vmatprep.subr.mxu0 0.0
    %1488 = vmatpush2.msra.mxu0 0.0
    %1489 = vmatprep.subr.mxu0 0.0
    %1490 = vmatpush2.msra.mxu0 0.0
    %1491 = vmatprep.subr.mxu0 0.0
    %1492 = vmatpush2.msra.mxu0 0.0
    %1493 = vmatprep.subr.mxu0 0.0
    %1494 = vmatpush2.msra.mxu0 0.0
    %1495 = vmatprep.mubr.f32.mxu0 0.0
    %1496 = vmatmul.mubr.f32.gmra.mxu0 %v1195
    %v1497 = vpop.f32.mrf.mxu0
    %v1498 = vadd.f32 %v1186, %v1497
    %v1499 = vpop.f32.mrf.mxu0
    %v1500 = vadd.f32 %v1186, %v1499
    %1501 = vmatprep.mubr.f32.mxu0 0.0
    %1502 = vmatmul.mubr.f32.gmra.mxu0 %v1198
    %v1503 = vpop.f32.mrf.mxu0
    %v1504 = vadd.f32 %v1191, %v1503
    %v1505 = vpop.f32.mrf.mxu0
    %v1506 = vadd.f32 %v1191, %v1505
    %1507 = vdwg.mxu0
    %1508 = vst [vmem:[#allocation2] sm:$0xff] %v1267
    %1509 = vst [vmem:[#allocation2 + $0x8] sm:$0xff] %v1269
    %1510 = vst [vmem:[#allocation2 + $0x10] sm:$0xff] %v1344
    %1511 = vst [vmem:[#allocation2 + $0x18] sm:$0xff] %v1346
    %1512 = vst [vmem:[#allocation2 + $0x20] sm:$0xff] %v1421
    %1513 = vst [vmem:[#allocation2 + $0x28] sm:$0xff] %v1423
    %1514 = vst [vmem:[#allocation2 + $0x30] sm:$0xff] %v1498
    %1515 = vst [vmem:[#allocation2 + $0x38] sm:$0xff] %v1500
    %1516 = vst [vmem:[#allocation2 + $0x40] sm:$0xff] %v1273
    %1517 = vst [vmem:[#allocation2 + $0x48] sm:$0xff] %v1275
    %1518 = vst [vmem:[#allocation2 + $0x50] sm:$0xff] %v1350
    %1519 = vst [vmem:[#allocation2 + $0x58] sm:$0xff] %v1352
    %1520 = vst [vmem:[#allocation2 + $0x60] sm:$0xff] %v1427
    %1521 = vst [vmem:[#allocation2 + $0x68] sm:$0xff] %v1429
    %1522 = vst [vmem:[#allocation2 + $0x70] sm:$0xff] %v1504
    %1523 = vst [vmem:[#allocation2 + $0x78] sm:$0xff] %v1506
    // Predicated region
    $region34: #{tpu_custom_call.1} parent=1 // pred_check
      _
    $region35: #{tpu_custom_call.1} parent=1 // pred_check_branch
      %1525 = sbr.rel (0) target = $region37
    $region36: #{tpu_custom_call.1} parent=1 // pred_region
      %s1527 = ssub.s32 2048, 2048
      %1528 = vsyncadd [#allocation3], %s1527
      %s1529 = sshll.u32 [#allocation2], 4
      %s1530 = int_to_ptr.vmem [resolvable:$true] %s1529
      %1535 = dma.vmem_to_hbm [thread:$0]  %s1530, 2048, %s8, [#allocation3], 1024, 1024, 64
    $region37: #{tpu_custom_call.1} parent=1 // pred_fallthru
      _
    // Predicated region
    $region38: #{tpu_custom_call.1} parent=1 // pred_check
      _
    $region39: #{tpu_custom_call.1} parent=1 // pred_check_branch
      %1537 = sbr.rel (0) target = $region41
    $region40: #{tpu_custom_call.1} parent=1 // pred_region
      %1538 = dma.done [#allocation3], 2048
    $region41: #{tpu_custom_call.1} parent=1 // pred_fallthru
      _
    %1539 = vsyncpa [#allocation3], 1

</llo_original>
